<compile_context>
chip_gen: v6e
topology: v6e:2x2x1
jax: 0.10.0
libtpu: 0.0.40
codegen_flags: <defaults>
</compile_context>

<pallas_src>
import functools

import numpy as np
import jax
import jax.numpy as jnp
from jax.experimental import pallas as pl
from jax.experimental.pallas import tpu as pltpu


# dtype fed to the MXU for the conv contraction (accumulation stays f32).
CONV_MXU_DTYPE = jnp.bfloat16


# ----------------------------------------------------------------------------
# Bilinear (align_corners=False) interpolation matrices — exact PyTorch
# nn.Upsample semantics; 2-tap per output row/col.
# ----------------------------------------------------------------------------
def _make_interp_matrix(out_size: int, in_size: int) -> np.ndarray:
    scale = in_size / out_size
    i = np.arange(out_size, dtype=np.float64)
    src = (i + 0.5) * scale - 0.5
    src = np.clip(src, 0.0, None)                       # PyTorch clamps negatives to 0
    i0 = np.clip(np.floor(src).astype(np.int64), 0, in_size - 1)
    i1 = np.minimum(i0 + 1, in_size - 1)
    w1 = (src - i0).astype(np.float32)
    w0 = 1.0 - w1
    m = np.zeros((out_size, in_size), dtype=np.float32)
    m[np.arange(out_size), i0] += w0
    m[np.arange(out_size), i1] += w1
    return m


# ----------------------------------------------------------------------------
# Fused Deconv kernel (one batch element per grid step).
# ----------------------------------------------------------------------------
def _deconv_kernel(wh_ref, wwT_ref, w_ref, b_ref, x_ref, o_ref, col_ref,
                   *, up_first: bool, conv_h: int, conv_w: int):
    """
    wh_ref : (H_out, H_in)   f32  bilinear row-interpolation matrix
    wwT_ref: (W_in,  W_out)  f32  bilinear col-interpolation matrix (transposed)
    w_ref  : (C_out, 9*C_in)      im2col conv weights (CONV_MXU_DTYPE)
    b_ref  : (C_out, 1)      f32  conv bias
    x_ref  : (C_in, H_in, W_in)   one batch element
    o_ref  : (C_out, H_out, W_out)
    col_ref: (9*C_in, conv_h, conv_w) f32 scratch — im2col matrix; its zero
             border strips double as the implicit 1-pixel zero halo.
    """
    c_in = x_ref.shape[0]

    def resize(t):  # bilinear resize of a (C, h, w) f32 block via two matmuls
        t = jnp.einsum("chw,wW->chW", t, wwT_ref[...],
                       preferred_element_type=jnp.float32)
        return jnp.einsum("Hh,chw->cHw", wh_ref[...], t,
                          preferred_element_type=jnp.float32)

    x = x_ref[...].astype(jnp.float32)
    conv_in = resize(x) if up_first else x              # (C_in, conv_h, conv_w)

    # Build the im2col matrix fully in VMEM (no host-side jnp.pad / HBM copy):
    # zero-init, then write only the in-bounds shifted window of each tap.
    col_ref[...] = jnp.zeros(col_ref.shape, col_ref.dtype)
    for dy in range(3):
        y0, y1 = max(0, 1 - dy), min(conv_h, conv_h - dy + 1)
        for dx in range(3):
            x0, x1 = max(0, 1 - dx), min(conv_w, conv_w - dx + 1)
            k = dy * 3 + dx
            col_ref[k * c_in:(k + 1) * c_in, y0:y1, x0:x1] = (
                conv_in[:, y0 + dy - 1:y1 + dy - 1, x0 + dx - 1:x1 + dx - 1])

    # Single MXU contraction with K = 9*C_in (bf16 inputs, f32 accumulate).
    acc = jnp.einsum("oc,chw->ohw", w_ref[...],
                     col_ref[...].astype(w_ref.dtype),
                     preferred_element_type=jnp.float32)
    acc = acc + b_ref[...].astype(jnp.float32)[:, :, None]

    out = acc if up_first else resize(acc)
    o_ref[...] = out.astype(o_ref.dtype)


# ----------------------------------------------------------------------------
# Wrapper (padding=None path; len(size)==2 -> bilinear)
# ----------------------------------------------------------------------------
def deconv_forward(x, weight, bias, size):
    # TODO(synk): len(size)==1 (linear) / len(size)==3 (trilinear) branches and
    # the custom `padding` module argument are not implemented (defaults used).
    n, c_in, h_in, w_in = x.shape
    h_out, w_out = int(size[0]), int(size[1])
    c_out = weight.shape[0]

    ratio = (h_in * w_in) / (h_out * w_out)
    up_first = ratio < 1.0
    conv_h, conv_w = (h_out, w_out) if up_first else (h_in, w_in)

    # Trace-time constants.
    wh = jnp.asarray(_make_interp_matrix(h_out, h_in))           # (H_out, H_in)
    wwT = jnp.asarray(_make_interp_matrix(w_out, w_in).T)        # (W_in, W_out)
    # im2col weight layout: [o, (dy*3 + dx)*C_in + c] = weight[o, c, dy, dx]
    w_im2col = jnp.transpose(weight, (0, 2, 3, 1)).reshape(c_out, 9 * c_in)
    w_im2col = w_im2col.astype(CONV_MXU_DTYPE)
    b_r = bias.reshape(c_out, 1).astype(jnp.float32)

    kernel = functools.partial(_deconv_kernel, up_first=up_first,
                               conv_h=conv_h, conv_w=conv_w)

    return pl.pallas_call(
        kernel,
        out_shape=jax.ShapeDtypeStruct((n, c_out, h_out, w_out), x.dtype),
        grid=(n,),
        in_specs=[
            pl.BlockSpec((h_out, h_in), lambda i: (0, 0)),
            pl.BlockSpec((w_in, w_out), lambda i: (0, 0)),
            pl.BlockSpec((c_out, 9 * c_in), lambda i: (0, 0)),
            pl.BlockSpec((c_out, 1), lambda i: (0, 0)),
            pl.BlockSpec((None, c_in, h_in, w_in), lambda i: (i, 0, 0, 0)),
        ],
        out_specs=pl.BlockSpec((None, c_out, h_out, w_out), lambda i: (i, 0, 0, 0)),
        scratch_shapes=[pltpu.VMEM((9 * c_in, conv_h, conv_w), jnp.float32)],
        compiler_params=pltpu.CompilerParams(
            dimension_semantics=("parallel",),
            vmem_limit_bytes=32 * 1024 * 1024,
        ),
    )(wh, wwT, w_im2col, b_r, x)


# ----------------------------------------------------------------------------
# Pure-JAX reference (same semantics) for a loose self-check.
# ----------------------------------------------------------------------------
def _reference(x, weight, bias, size):
    h_in, w_in = x.shape[-2], x.shape[-1]
    h_out, w_out = int(size[0]), int(size[1])
    wh = jnp.asarray(_make_interp_matrix(h_out, h_in))
    ww = jnp.asarray(_make_interp_matrix(w_out, w_in))

    def resize(t):
        t = jnp.einsum("nchw,Ww->nchW", t, ww)
        return jnp.einsum("nchw,Hh->ncHw", t, wh)

    def conv(t):
        y = jax.lax.conv_general_dilated(
            t, weight, window_strides=(1, 1), padding=((1, 1), (1, 1)),
            dimension_numbers=("NCHW", "OIHW", "NCHW"))
        return y + bias[None, :, None, None]

    if (h_in * w_in) / (h_out * w_out) < 1.0:
        return conv(resize(x))
    return resize(conv(x))


if __name__ == "__main__":
    key = jax.random.PRNGKey(0)
    k_x, k_w, k_b = jax.random.split(key, 3)

    N, C_IN, C_OUT = 2, 4, 8
    H_IN = W_IN = 8

    x = jax.random.normal(k_x, (N, C_IN, H_IN, W_IN), dtype=jnp.float32)

    # Parameter shapes match nn.Conv2d(C_IN, C_OUT, 3, stride=1, padding=1)
    fan_in = C_IN * 3 * 3
    bound = 1.0 / np.sqrt(fan_in)
    weight = jax.random.uniform(k_w, (C_OUT, C_IN, 3, 3),
                                minval=-bound, maxval=bound, dtype=jnp.float32)
    bias = jax.random.uniform(k_b, (C_OUT,),
                              minval=-bound, maxval=bound, dtype=jnp.float32)

    deconv = jax.jit(deconv_forward, static_argnames=("size",))

    # Branch 1: ratio < 1  ->  bilinear upsample then 3x3 conv (fused kernel).
    size_up = (16, 16)
    out_up = jax.block_until_ready(deconv(x, weight, bias, size=size_up))
    assert out_up.shape == (N, C_OUT, 16, 16), out_up.shape

    # Branch 2: ratio >= 1 ->  3x3 conv then bilinear resize (fused kernel).
    size_dn = (4, 4)
    out_dn = jax.block_until_ready(deconv(x, weight, bias, size=size_dn))
    assert out_dn.shape == (N, C_OUT, 4, 4), out_dn.shape

    # Loose numeric self-check (bf16 MXU inputs -> ~0.5% max relative error).
    np.testing.assert_allclose(np.asarray(out_up),
                               np.asarray(_reference(x, weight, bias, size_up)),
                               rtol=2e-2, atol=2e-2)
    np.testing.assert_allclose(np.asarray(out_dn),
                               np.asarray(_reference(x, weight, bias, size_dn)),
                               rtol=2e-2, atol=2e-2)
    assert bool(jnp.all(jnp.isfinite(out_up))) and bool(jnp.all(jnp.isfinite(out_dn)))

    print("KERNEL_OK")
</pallas_src>

<mosaic_0001>
module attributes {stable_mosaic.version = 11 : i64} {
  func.func @_deconv_kernel(%arg0: i32, %arg1: memref<16x8xf32, #tpu.memory_space<vmem>>, %arg2: memref<8x16xf32, #tpu.memory_space<vmem>>, %arg3: memref<8x36xbf16, #tpu.memory_space<vmem>>, %arg4: memref<8x1xf32, #tpu.memory_space<vmem>>, %arg5: memref<1x4x8x8xf32, #tpu.memory_space<vmem>>, %arg6: memref<1x8x16x16xf32, #tpu.memory_space<vmem>>, %arg7: memref<36x16x16xf32, #tpu.memory_space<vmem>>) attributes {dimension_semantics = [#tpu.dimension_semantics<parallel>], iteration_bounds = array<i64: 2>, scalar_prefetch = 0 : i64, scratch_operands = 1 : i64, tpu.core_type = #tpu.core_type<tc>, window_params = [{pipeline_mode = #tpu.pipeline_mode<synchronous>, transform_indices = @transform_0, window_bounds = array<i64: 16, 8>}, {pipeline_mode = #tpu.pipeline_mode<synchronous>, transform_indices = @transform_1, window_bounds = array<i64: 8, 16>}, {pipeline_mode = #tpu.pipeline_mode<synchronous>, transform_indices = @transform_2, window_bounds = array<i64: 8, 36>}, {pipeline_mode = #tpu.pipeline_mode<synchronous>, transform_indices = @transform_3, window_bounds = array<i64: 8, 1>}, {transform_indices = @transform_4, window_bounds = array<i64: 1, 4, 8, 8>}, {transform_indices = @transform_5, window_bounds = array<i64: 1, 8, 16, 16>}]} {
    %c0 = arith.constant 0 : index
    %c0_0 = arith.constant 0 : index
    %c0_1 = arith.constant 0 : index
    %c0_2 = arith.constant 0 : index
    %0 = vector.load %arg5[%c0, %c0_0, %c0_1, %c0_2] : memref<1x4x8x8xf32, #tpu.memory_space<vmem>>, vector<1x4x8x8xf32>
    %1 = vector.shape_cast %0 : vector<1x4x8x8xf32> to vector<4x8x8xf32>
    %c0_3 = arith.constant 0 : index
    %c0_4 = arith.constant 0 : index
    %2 = vector.load %arg2[%c0_3, %c0_4] : memref<8x16xf32, #tpu.memory_space<vmem>>, vector<8x16xf32>
    "tpu.trace_start"() <{level = 10 : i32, message = "chw,wW->chW"}> : () -> ()
    %cst = arith.constant dense<0.000000e+00> : vector<4x8x16xf32>
    %3 = tpu.matmul %1, %2, %cst {dimension_numbers = #tpu.dot_dimension_numbers<[2], [0], [0, 1], [1], [0, 0, 0, 1, 1, 1], [], []>} : vector<4x8x8xf32>, vector<8x16xf32>, vector<4x8x16xf32> -> vector<4x8x16xf32>
    "tpu.trace_stop"() : () -> ()
    %c0_5 = arith.constant 0 : index
    %c0_6 = arith.constant 0 : index
    %4 = vector.load %arg1[%c0_5, %c0_6] : memref<16x8xf32, #tpu.memory_space<vmem>>, vector<16x8xf32>
    "tpu.trace_start"() <{level = 10 : i32, message = "Hh,chw->cHw"}> : () -> ()
    %cst_7 = arith.constant dense<0.000000e+00> : vector<4x16x16xf32>
    %5 = tpu.matmul %3, %4, %cst_7 {dimension_numbers = #tpu.dot_dimension_numbers<[1], [1], [0, 2], [0], [0, 0, 0, 2, 1, 0], [], []>} : vector<4x8x16xf32>, vector<16x8xf32>, vector<4x16x16xf32> -> vector<4x16x16xf32>
    %6 = tpu.transpose %5, [0, 2, 1] : vector<4x16x16xf32> -> vector<4x16x16xf32>
    %cst_8 = arith.constant 0.000000e+00 : f32
    "tpu.trace_stop"() : () -> ()
    %7 = vector.broadcast %cst_8 : f32 to vector<36x16x16xf32>
    %c0_9 = arith.constant 0 : index
    %c0_10 = arith.constant 0 : index
    %c0_11 = arith.constant 0 : index
    %8 = vector.load %arg7[%c0_9, %c0_10, %c0_11] : memref<36x16x16xf32, #tpu.memory_space<vmem>>, vector<36x16x16xf32>
    tpu.vector_store %arg7[%c0_9, %c0_10, %c0_11], %7 {strides = array<i32>} : memref<36x16x16xf32, #tpu.memory_space<vmem>>, vector<36x16x16xf32>,
    %9 = vector.extract_strided_slice %6 {offsets = [0, 0, 0], sizes = [4, 15, 15], strides = [1, 1, 1]} : vector<4x16x16xf32> to vector<4x15x15xf32>
    %c0_12 = arith.constant 0 : index
    %c1 = arith.constant 1 : index
    %c1_13 = arith.constant 1 : index
    %10 = vector.load %arg7[%c0_12, %c1, %c1_13] : memref<36x16x16xf32, #tpu.memory_space<vmem>>, vector<4x15x15xf32>
    tpu.vector_store %arg7[%c0_12, %c1, %c1_13], %9 {strides = array<i32>} : memref<36x16x16xf32, #tpu.memory_space<vmem>>, vector<4x15x15xf32>,
    %11 = vector.extract_strided_slice %6 {offsets = [0, 0, 0], sizes = [4, 15, 16], strides = [1, 1, 1]} : vector<4x16x16xf32> to vector<4x15x16xf32>
    %c4 = arith.constant 4 : index
    %c1_14 = arith.constant 1 : index
    %c0_15 = arith.constant 0 : index
    %12 = vector.load %arg7[%c4, %c1_14, %c0_15] : memref<36x16x16xf32, #tpu.memory_space<vmem>>, vector<4x15x16xf32>
    tpu.vector_store %arg7[%c4, %c1_14, %c0_15], %11 {strides = array<i32>} : memref<36x16x16xf32, #tpu.memory_space<vmem>>, vector<4x15x16xf32>,
    %13 = vector.extract_strided_slice %6 {offsets = [0, 0, 1], sizes = [4, 15, 15], strides = [1, 1, 1]} : vector<4x16x16xf32> to vector<4x15x15xf32>
    %c8 = arith.constant 8 : index
    %c1_16 = arith.constant 1 : index
    %c0_17 = arith.constant 0 : index
    %14 = vector.load %arg7[%c8, %c1_16, %c0_17] : memref<36x16x16xf32, #tpu.memory_space<vmem>>, vector<4x15x15xf32>
    tpu.vector_store %arg7[%c8, %c1_16, %c0_17], %13 {strides = array<i32>} : memref<36x16x16xf32, #tpu.memory_space<vmem>>, vector<4x15x15xf32>,
    %15 = vector.extract_strided_slice %6 {offsets = [0, 0, 0], sizes = [4, 16, 15], strides = [1, 1, 1]} : vector<4x16x16xf32> to vector<4x16x15xf32>
    %c12 = arith.constant 12 : index
    %c0_18 = arith.constant 0 : index
    %c1_19 = arith.constant 1 : index
    %16 = vector.load %arg7[%c12, %c0_18, %c1_19] : memref<36x16x16xf32, #tpu.memory_space<vmem>>, vector<4x16x15xf32>
    tpu.vector_store %arg7[%c12, %c0_18, %c1_19], %15 {strides = array<i32>} : memref<36x16x16xf32, #tpu.memory_space<vmem>>, vector<4x16x15xf32>,
    %c16 = arith.constant 16 : index
    %c0_20 = arith.constant 0 : index
    %c0_21 = arith.constant 0 : index
    %17 = vector.load %arg7[%c16, %c0_20, %c0_21] : memref<36x16x16xf32, #tpu.memory_space<vmem>>, vector<4x16x16xf32>
    tpu.vector_store %arg7[%c16, %c0_20, %c0_21], %6 {strides = array<i32>} : memref<36x16x16xf32, #tpu.memory_space<vmem>>, vector<4x16x16xf32>,
    %18 = vector.extract_strided_slice %6 {offsets = [0, 0, 1], sizes = [4, 16, 15], strides = [1, 1, 1]} : vector<4x16x16xf32> to vector<4x16x15xf32>
    %c20 = arith.constant 20 : index
    %c0_22 = arith.constant 0 : index
    %c0_23 = arith.constant 0 : index
    %19 = vector.load %arg7[%c20, %c0_22, %c0_23] : memref<36x16x16xf32, #tpu.memory_space<vmem>>, vector<4x16x15xf32>
    tpu.vector_store %arg7[%c20, %c0_22, %c0_23], %18 {strides = array<i32>} : memref<36x16x16xf32, #tpu.memory_space<vmem>>, vector<4x16x15xf32>,
    %20 = vector.extract_strided_slice %6 {offsets = [0, 1, 0], sizes = [4, 15, 15], strides = [1, 1, 1]} : vector<4x16x16xf32> to vector<4x15x15xf32>
    %c24 = arith.constant 24 : index
    %c0_24 = arith.constant 0 : index
    %c1_25 = arith.constant 1 : index
    %21 = vector.load %arg7[%c24, %c0_24, %c1_25] : memref<36x16x16xf32, #tpu.memory_space<vmem>>, vector<4x15x15xf32>
    tpu.vector_store %arg7[%c24, %c0_24, %c1_25], %20 {strides = array<i32>} : memref<36x16x16xf32, #tpu.memory_space<vmem>>, vector<4x15x15xf32>,
    %22 = vector.extract_strided_slice %6 {offsets = [0, 1, 0], sizes = [4, 15, 16], strides = [1, 1, 1]} : vector<4x16x16xf32> to vector<4x15x16xf32>
    %c28 = arith.constant 28 : index
    %c0_26 = arith.constant 0 : index
    %c0_27 = arith.constant 0 : index
    %23 = vector.load %arg7[%c28, %c0_26, %c0_27] : memref<36x16x16xf32, #tpu.memory_space<vmem>>, vector<4x15x16xf32>
    tpu.vector_store %arg7[%c28, %c0_26, %c0_27], %22 {strides = array<i32>} : memref<36x16x16xf32, #tpu.memory_space<vmem>>, vector<4x15x16xf32>,
    %24 = vector.extract_strided_slice %6 {offsets = [0, 1, 1], sizes = [4, 15, 15], strides = [1, 1, 1]} : vector<4x16x16xf32> to vector<4x15x15xf32>
    %c32 = arith.constant 32 : index
    %c0_28 = arith.constant 0 : index
    %c0_29 = arith.constant 0 : index
    %25 = vector.load %arg7[%c32, %c0_28, %c0_29] : memref<36x16x16xf32, #tpu.memory_space<vmem>>, vector<4x15x15xf32>
    tpu.vector_store %arg7[%c32, %c0_28, %c0_29], %24 {strides = array<i32>} : memref<36x16x16xf32, #tpu.memory_space<vmem>>, vector<4x15x15xf32>,
    %c0_30 = arith.constant 0 : index
    %c0_31 = arith.constant 0 : index
    %26 = vector.load %arg3[%c0_30, %c0_31] : memref<8x36xbf16, #tpu.memory_space<vmem>>, vector<8x36xbf16>
    %c0_32 = arith.constant 0 : index
    %c0_33 = arith.constant 0 : index
    %c0_34 = arith.constant 0 : index
    %27 = vector.load %arg7[%c0_32, %c0_33, %c0_34] : memref<36x16x16xf32, #tpu.memory_space<vmem>>, vector<36x16x16xf32>
    %28 = arith.truncf %27 : vector<36x16x16xf32> to vector<36x16x16xbf16>
    "tpu.trace_start"() <{level = 10 : i32, message = "oc,chw->ohw"}> : () -> ()
    %cst_35 = arith.constant dense<0.000000e+00> : vector<8x16x16xf32>
    %29 = tpu.matmul %26, %28, %cst_35 {dimension_numbers = #tpu.dot_dimension_numbers<[1], [0], [0], [1, 2], [0, 0, 1, 1, 1, 2], [], []>} : vector<8x36xbf16>, vector<36x16x16xbf16>, vector<8x16x16xf32> -> vector<8x16x16xf32>
    "tpu.trace_stop"() : () -> ()
    %c0_36 = arith.constant 0 : index
    %c0_37 = arith.constant 0 : index
    %30 = vector.load %arg4[%c0_36, %c0_37] : memref<8x1xf32, #tpu.memory_space<vmem>>, vector<8x1xf32>
    %31 = vector.shape_cast %30 : vector<8x1xf32> to vector<8x1x1xf32>
    %32 = vector.broadcast %31 : vector<8x1x1xf32> to vector<8x16x16xf32>
    %33 = arith.addf %29, %32 : vector<8x16x16xf32>
    %c0_38 = arith.constant 0 : index
    %c0_39 = arith.constant 0 : index
    %c0_40 = arith.constant 0 : index
    %c0_41 = arith.constant 0 : index
    %34 = vector.load %arg6[%c0_38, %c0_39, %c0_40, %c0_41] : memref<1x8x16x16xf32, #tpu.memory_space<vmem>>, vector<1x8x16x16xf32>
    %35 = vector.shape_cast %34 : vector<1x8x16x16xf32> to vector<8x16x16xf32>
    %36 = vector.shape_cast %33 : vector<8x16x16xf32> to vector<1x8x16x16xf32>
    tpu.vector_store %arg6[%c0_38, %c0_39, %c0_40, %c0_41], %36 {strides = array<i32>} : memref<1x8x16x16xf32, #tpu.memory_space<vmem>>, vector<1x8x16x16xf32>,
    return
  }
  func.func @transform_0(%arg0: i32) -> (i32, i32) {
    %c0_i32 = arith.constant 0 : i32
    %c0_i32_0 = arith.constant 0 : i32
    %c0_i32_1 = arith.constant 0 : i32
    return %c0_i32, %c0_i32_0 : i32, i32
  }
  func.func @transform_1(%arg0: i32) -> (i32, i32) {
    %c0_i32 = arith.constant 0 : i32
    %c0_i32_0 = arith.constant 0 : i32
    %c0_i32_1 = arith.constant 0 : i32
    return %c0_i32, %c0_i32_0 : i32, i32
  }
  func.func @transform_2(%arg0: i32) -> (i32, i32) {
    %c0_i32 = arith.constant 0 : i32
    %c0_i32_0 = arith.constant 0 : i32
    %c0_i32_1 = arith.constant 0 : i32
    return %c0_i32, %c0_i32_0 : i32, i32
  }
  func.func @transform_3(%arg0: i32) -> (i32, i32) {
    %c0_i32 = arith.constant 0 : i32
    %c0_i32_0 = arith.constant 0 : i32
    %c0_i32_1 = arith.constant 0 : i32
    return %c0_i32, %c0_i32_0 : i32, i32
  }
  func.func @transform_4(%arg0: i32) -> (i32, i32, i32, i32) {
    %c0_i32 = arith.constant 0 : i32
    %c0_i32_0 = arith.constant 0 : i32
    %c0_i32_1 = arith.constant 0 : i32
    %c0_i32_2 = arith.constant 0 : i32
    return %arg0, %c0_i32, %c0_i32_0, %c0_i32_1 : i32, i32, i32, i32
  }
  func.func @transform_5(%arg0: i32) -> (i32, i32, i32, i32) {
    %c0_i32 = arith.constant 0 : i32
    %c0_i32_0 = arith.constant 0 : i32
    %c0_i32_1 = arith.constant 0 : i32
    %c0_i32_2 = arith.constant 0 : i32
    return %arg0, %c0_i32, %c0_i32_0, %c0_i32_1 : i32, i32, i32, i32
  }
}

</mosaic_0001>

<llo_original>
// kernel: deconv_forward.1
$region0: #{deconv_forward.1}
  #allocation0 [shape = 'u32[]', space=smem, size = 0x4, offset = 0x4, fixed_abs, tag = 'smem constant byte address 0x4 - core index']
  #allocation1 [shape = 'u32[144,128]{1,0:T(1,128)}', space=vmem, size = 0x12000, scoped, tag = 'internal scratch']
  #allocation2 [shape = 'f32[36,16,16]{2,1,0:T(8,128)}', space=vmem, size = 0x48000, scoped, tag = 'scratch operand']
  %s0 = inlined_call_operand.vmem [shape: f32[16,8], index: 0, kind: input, shape index: {}]
  %s1 = inlined_call_operand.vmem [shape: f32[8,16], index: 1, kind: input, shape index: {}]
  %s2 = inlined_call_operand.vmem [shape: bf16[8,36], index: 2, kind: input, shape index: {}]
  %s3 = inlined_call_operand.vmem [shape: f32[8,1], index: 3, kind: input, shape index: {}]
  %s4 = inlined_call_operand.vmem [shape: f32[2,4,8,8], index: 4, kind: input, shape index: {}]
  %s5 = inlined_call_operand.hbm [shape: f32[2,8,16,16], index: 5, kind: output, shape index: {}]
  %s6 = sld [smem:[#allocation0]]
  $region53: #{deconv_forward.1} parent=0
    _
  %s8 = ssub.s32 1, %s6
  %s9 = scalar_select 0, %s8, %s6
  $region1: #{deconv_forward.1} parent=0
    #allocation3 [shape = 'u8[131072]{0}', space=vmem, size = 0x20000, scoped, tag = 'output window, operand 0']
    #allocation4 [shape = 's32[2]{0}', space=sflag, size = 0x8, scoped, tag = 'scoped memory for deconv_forward.1']
    %10 = vsyncpa [#allocation4], 0
    %s11 = scalar_lea.sflag [#allocation4], 1
    %12 = vsyncpa %s11, 0
    loop: start=0, step=1, limit=4
    $region2: #{deconv_forward.1} parent=1 // loop_pre_header
      _
    $region3: #{deconv_forward.1} parent=1 // loop_header
      %s14 = sphi 0, %s18
      %p15 = scmp.ge.s32.totalorder %s14, 4
      %s22 = sphi 0, %s22
      %s24 = sphi 0, %s22
      %s25 = sphi 0, %s24
      %s39 = sphi 0, %s25
      %s43 = sphi 0, %s43
      %s45 = sphi 0, %s43
      %s46 = sphi 0, %s45
      %s60 = sphi 0, %s46
      %s64 = sphi 0, %s64
      %s66 = sphi 0, %s64
      %s67 = sphi 0, %s66
      %s81 = sphi 0, %s67
      %s85 = sphi 0, %s85
      %s87 = sphi 0, %s85
      %s88 = sphi 0, %s87
      %s102 = sphi 0, %s88
      %s108 = sphi 0, %s110
      %s111 = sphi 0, %s108
      %s112 = sphi 0, %s111
      %s128 = sphi 0, %s112
      %s134 = sphi 0, %s136
      %s137 = sphi 0, %s134
      %s138 = sphi 0, %s137
      %s154 = sphi 0, %s138
    $region4: #{deconv_forward.1} parent=1 // loop_header_branch
      %17 = sbr.rel (%p15) target = $region8
    $region5: #{deconv_forward.1} parent=1 // loop_body
      %s19 = ssub.s32 %s14, 1
      %s20 = ssub.s32 %s14, 2
      %s21 = sadd.s32 %s14, 1
      %s23 = sadd.s32 %s22, 1
      %p26 = scmp.eq.s32.totalorder %s14, 1
      %p27 = scmp.ne.s32.totalorder %s22, %s24
      %p28 = scmp.eq.s32.totalorder %s14, 0
      %p29 = por %p27, %p28
      %p30 = scmp.ne.s32.totalorder %s22, %s24
      %p31 = scmp.eq.s32.totalorder %s19, 1
      %p32 = por %p30, %p31
      %p33 = scmp.ne.s32.totalorder %s24, %s25
      %p34 = scmp.eq.s32.totalorder %s19, 0
      %p35 = por %p33, %p34
      %p36 = scmp.ne.s32.totalorder %s24, %s25
      %p37 = scmp.eq.s32.totalorder %s20, 1
      %p38 = por %p36, %p37
      %p40 = scmp.ne.s32.totalorder %s25, %s39
      %p41 = scmp.eq.s32.totalorder %s20, 0
      %p42 = por %p40, %p41
      %s44 = sadd.s32 %s43, 1
      %p47 = scmp.eq.s32.totalorder %s14, 1
      %p48 = scmp.ne.s32.totalorder %s43, %s45
      %p49 = scmp.eq.s32.totalorder %s14, 0
      %p50 = por %p48, %p49
      %p51 = scmp.ne.s32.totalorder %s43, %s45
      %p52 = scmp.eq.s32.totalorder %s19, 1
      %p53 = por %p51, %p52
      %p54 = scmp.ne.s32.totalorder %s45, %s46
      %p55 = scmp.eq.s32.totalorder %s19, 0
      %p56 = por %p54, %p55
      %p57 = scmp.ne.s32.totalorder %s45, %s46
      %p58 = scmp.eq.s32.totalorder %s20, 1
      %p59 = por %p57, %p58
      %p61 = scmp.ne.s32.totalorder %s46, %s60
      %p62 = scmp.eq.s32.totalorder %s20, 0
      %p63 = por %p61, %p62
      %s65 = sadd.s32 %s64, 1
      %p68 = scmp.eq.s32.totalorder %s14, 1
      %p69 = scmp.ne.s32.totalorder %s64, %s66
      %p70 = scmp.eq.s32.totalorder %s14, 0
      %p71 = por %p69, %p70
      %p72 = scmp.ne.s32.totalorder %s64, %s66
      %p73 = scmp.eq.s32.totalorder %s19, 1
      %p74 = por %p72, %p73
      %p75 = scmp.ne.s32.totalorder %s66, %s67
      %p76 = scmp.eq.s32.totalorder %s19, 0
      %p77 = por %p75, %p76
      %p78 = scmp.ne.s32.totalorder %s66, %s67
      %p79 = scmp.eq.s32.totalorder %s20, 1
      %p80 = por %p78, %p79
      %p82 = scmp.ne.s32.totalorder %s67, %s81
      %p83 = scmp.eq.s32.totalorder %s20, 0
      %p84 = por %p82, %p83
      %s86 = sadd.s32 %s85, 1
      %p89 = scmp.eq.s32.totalorder %s14, 1
      %p90 = scmp.ne.s32.totalorder %s85, %s87
      %p91 = scmp.eq.s32.totalorder %s14, 0
      %p92 = por %p90, %p91
      %p93 = scmp.ne.s32.totalorder %s85, %s87
      %p94 = scmp.eq.s32.totalorder %s19, 1
      %p95 = por %p93, %p94
      %p96 = scmp.ne.s32.totalorder %s87, %s88
      %p97 = scmp.eq.s32.totalorder %s19, 0
      %p98 = por %p96, %p97
      %p99 = scmp.ne.s32.totalorder %s87, %s88
      %p100 = scmp.eq.s32.totalorder %s20, 1
      %p101 = por %p99, %p100
      %p103 = scmp.ne.s32.totalorder %s88, %s102
      %p104 = scmp.eq.s32.totalorder %s20, 0
      %p105 = por %p103, %p104
      %s106 = ssub.s32 %s14, %s21
      %p107 = scmp.eq.s32.totalorder %s106, 0
      %s109 = sadd.s32 %s108, 1
      %s110 = scalar_select %p107, %s108, %s109
      %p113 = pneg %p107
      %p114 = scmp.eq.s32.totalorder %s14, 1
      %p115 = por %p113, %p114
      %p116 = scmp.ne.s32.totalorder %s108, %s111
      %p117 = scmp.eq.s32.totalorder %s14, 0
      %p118 = por %p116, %p117
      %p119 = scmp.ne.s32.totalorder %s108, %s111
      %p120 = scmp.eq.s32.totalorder %s19, 1
      %p121 = por %p119, %p120
      %p122 = scmp.ne.s32.totalorder %s111, %s112
      %p123 = scmp.eq.s32.totalorder %s19, 0
      %p124 = por %p122, %p123
      %p125 = scmp.ne.s32.totalorder %s111, %s112
      %p126 = scmp.eq.s32.totalorder %s20, 1
      %p127 = por %p125, %p126
      %p129 = scmp.ne.s32.totalorder %s112, %s128
      %p130 = scmp.eq.s32.totalorder %s20, 0
      %p131 = por %p129, %p130
      %s132 = ssub.s32 %s14, %s21
      %p133 = scmp.eq.s32.totalorder %s132, 0
      %s135 = sadd.s32 %s134, 1
      %s136 = scalar_select %p133, %s134, %s135
      %p139 = pneg %p133
      %p140 = scmp.eq.s32.totalorder %s14, 1
      %p141 = por %p139, %p140
      %p142 = scmp.ne.s32.totalorder %s134, %s137
      %p143 = scmp.eq.s32.totalorder %s14, 0
      %p144 = por %p142, %p143
      %p145 = scmp.ne.s32.totalorder %s134, %s137
      %p146 = scmp.eq.s32.totalorder %s19, 1
      %p147 = por %p145, %p146
      %p148 = scmp.ne.s32.totalorder %s137, %s138
      %p149 = scmp.eq.s32.totalorder %s19, 0
      %p150 = por %p148, %p149
      %p151 = scmp.ne.s32.totalorder %s137, %s138
      %p152 = scmp.eq.s32.totalorder %s20, 1
      %p153 = por %p151, %p152
      %p155 = scmp.ne.s32.totalorder %s138, %s154
      %p156 = scmp.eq.s32.totalorder %s20, 0
      %p157 = por %p155, %p156
      %p158 = scmp.le.s32.totalorder 1, %s14
      %p159 = scmp.lt.s32.totalorder %s14, 3
      %p160 = pnand %p158, %p159
      %p161 = pneg %p160
      // Predicated region
      $region9: #{deconv_forward.1} parent=5 // pred_check
        _
      $region10: #{deconv_forward.1} parent=5 // pred_check_branch
        %163 = sbr.rel (%p160) target = $region12
      $region11: #{deconv_forward.1} parent=5 // pred_region
        %s164 = ssub.s32 %s14, 1
        // Predicated region
        $region13: #{deconv_forward.1} parent=11 // pred_check
          %p165 = pneg %p35
        $region14: #{deconv_forward.1} parent=11 // pred_check_branch
          %167 = sbr.rel (%p165) target = $region16
        $region15: #{deconv_forward.1} parent=11 // pred_region
          _
        $region16: #{deconv_forward.1} parent=11 // pred_fallthru
          _
        // Predicated region
        $region17: #{deconv_forward.1} parent=11 // pred_check
          %p168 = pneg %p56
        $region18: #{deconv_forward.1} parent=11 // pred_check_branch
          %170 = sbr.rel (%p168) target = $region20
        $region19: #{deconv_forward.1} parent=11 // pred_region
          _
        $region20: #{deconv_forward.1} parent=11 // pred_fallthru
          _
        // Predicated region
        $region21: #{deconv_forward.1} parent=11 // pred_check
          %p171 = pneg %p77
        $region22: #{deconv_forward.1} parent=11 // pred_check_branch
          %173 = sbr.rel (%p171) target = $region24
        $region23: #{deconv_forward.1} parent=11 // pred_region
          _
        $region24: #{deconv_forward.1} parent=11 // pred_fallthru
          _
        // Predicated region
        $region25: #{deconv_forward.1} parent=11 // pred_check
          %p174 = pneg %p98
        $region26: #{deconv_forward.1} parent=11 // pred_check_branch
          %176 = sbr.rel (%p174) target = $region28
        $region27: #{deconv_forward.1} parent=11 // pred_region
          _
        $region28: #{deconv_forward.1} parent=11 // pred_fallthru
          _
      $region12: #{deconv_forward.1} parent=5 // pred_fallthru
        _
      %p177 = scmp.lt.s32.totalorder %s14, 2
      // Predicated region
      $region29: #{deconv_forward.1} parent=5 // pred_check
        %p178 = pneg %p177
      $region30: #{deconv_forward.1} parent=5 // pred_check_branch
        %180 = sbr.rel (%p178) target = $region32
      $region31: #{deconv_forward.1} parent=5 // pred_region
        // Predicated region
        $region33: #{deconv_forward.1} parent=31 // pred_check
          %p181 = pneg %p118
        $region34: #{deconv_forward.1} parent=31 // pred_check_branch
          %183 = sbr.rel (%p181) target = $region36
        $region35: #{deconv_forward.1} parent=31 // pred_region
          %p184 = scmp.lt.s32.totalorder %s14, 1
          %s185 = scalar_select %p184, %s14, 1
          %s186 = smul.addr %s185, 4
          %s187 = smul.addr %s186, 8
          %s188 = scalar_lea.vmem %s4, %s187
        $region36: #{deconv_forward.1} parent=31 // pred_fallthru
          _
      $region32: #{deconv_forward.1} parent=5 // pred_fallthru
        _
      %p189 = scmp.le.s32.totalorder 1, %s14
      %p190 = scmp.lt.s32.totalorder %s14, 3
      %p191 = pnand %p189, %p190
      %p192 = pneg %p191
      // Predicated region
      $region37: #{deconv_forward.1} parent=5 // pred_check
        _
      $region38: #{deconv_forward.1} parent=5 // pred_check_branch
        %194 = sbr.rel (%p191) target = $region40
      $region39: #{deconv_forward.1} parent=5 // pred_region
        %s195 = ssub.s32 %s14, 1
        %p196 = pneg %p35
        %p197 = pneg %p32
        %p198 = pneg %p56
        %p199 = pneg %p53
        %p200 = pneg %p77
        %p201 = pneg %p74
        %p202 = pneg %p98
        %p203 = pneg %p95
        %p204 = scmp.lt.s32.totalorder %s19, 1
        %s205 = scalar_select %p204, %s19, 1
        %s206 = smul.addr %s205, 4
        %s207 = smul.addr %s206, 8
        %s208 = scalar_lea.vmem %s4, %s207
        %p209 = pneg %p124
        %p210 = pneg %p121
        %p211 = pneg %p150
        %p212 = pneg %p147
        %s213 = sand.u32 %s137, 1
        %s214 = scalar_lea.sflag [#allocation4], %s213
        %s215 = sand.u32 %s137, 1
        %s216 = smul.addr %s215, 128
        %s217 = scalar_lea.vmem [#allocation3], %s216
        %p218 = scmp.lt.s32.totalorder %s19, 1
        %s219 = scalar_select %p218, %s19, 1
        %s220 = smul.addr %s219, 4
        %s221 = smul.addr %s220, 8
        %s222 = scalar_lea.vmem %s4, %s221
        %v224 = vld [vmem:[%s222] sm:$0xff]
        %v225 = vld [vmem:[%s222 + $0x8] sm:$0xff]
        %v226 = vld [vmem:[%s222 + $0x10] sm:$0xff]
        %v227 = vld [vmem:[%s222 + $0x18] sm:$0xff]
        %v228 = vld [vmem:[%s1] sm:$0xff]
        %vm229 = vcmask 64512
        %v231 = vsel %vm229, %v224, 0
        %v234 = vsel %vm229, %v225, 0
        %v237 = vsel %vm229, %v226, 0
        %v240 = vsel %vm229, %v227, 0
        %242 = vmatprep.subr.mxu0 0.0
        %243 = vmatpush1.msra.mxu0 0.0
        %244 = vmatprep.subr.mxu0 0.0
        %245 = vmatpush1.msra.mxu0 0.0
        %246 = vmatprep.subr.mxu0 0.0
        %247 = vmatpush1.msra.mxu0 0.0
        %248 = vmatprep.subr.mxu0 0.0
        %249 = vmatpush1.msra.mxu0 0.0
        %250 = vmatprep.subr.mxu0 0.0
        %251 = vmatpush1.msra.mxu0 0.0
        %252 = vmatprep.subr.mxu0 0.0
        %253 = vmatpush1.msra.mxu0 0.0
        %254 = vmatprep.subr.mxu0 0.0
        %255 = vmatpush1.msra.mxu0 0.0
        %256 = vmatprep.subr.mxu0 0.0
        %257 = vmatpush1.msra.mxu0 0.0
        %258 = vmatprep.subr.mxu0 0.0
        %259 = vmatpush1.msra.mxu0 0.0
        %260 = vmatprep.subr.mxu0 0.0
        %261 = vmatpush1.msra.mxu0 0.0
        %262 = vmatprep.subr.mxu0 0.0
        %263 = vmatpush1.msra.mxu0 0.0
        %264 = vmatprep.subr.mxu0 0.0
        %265 = vmatpush1.msra.mxu0 0.0
        %266 = vmatprep.subr.mxu0 0.0
        %267 = vmatpush1.msra.mxu0 0.0
        %268 = vmatprep.subr.mxu0 0.0
        %269 = vmatpush1.msra.mxu0 0.0
        %270 = vmatprep.subr.mxu0 0.0
        %271 = vmatpush1.msra.mxu0 0.0
        %272 = vmatprep.subr.mxu0 0.0
        %273 = vmatpush1.msra.mxu0 %v228
        %274 = vmatprep.subr.mxu0 0.0
        %275 = vmatpush2.msra.mxu0 0.0
        %276 = vmatprep.subr.mxu0 0.0
        %277 = vmatpush2.msra.mxu0 0.0
        %278 = vmatprep.subr.mxu0 0.0
        %279 = vmatpush2.msra.mxu0 0.0
        %280 = vmatprep.subr.mxu0 0.0
        %281 = vmatpush2.msra.mxu0 0.0
        %282 = vmatprep.subr.mxu0 0.0
        %283 = vmatpush2.msra.mxu0 0.0
        %284 = vmatprep.subr.mxu0 0.0
        %285 = vmatpush2.msra.mxu0 0.0
        %286 = vmatprep.subr.mxu0 0.0
        %287 = vmatpush2.msra.mxu0 0.0
        %288 = vmatprep.subr.mxu0 0.0
        %289 = vmatpush2.msra.mxu0 0.0
        %290 = vmatprep.subr.mxu0 0.0
        %291 = vmatpush2.msra.mxu0 0.0
        %292 = vmatprep.subr.mxu0 0.0
        %293 = vmatpush2.msra.mxu0 0.0
        %294 = vmatprep.subr.mxu0 0.0
        %295 = vmatpush2.msra.mxu0 0.0
        %296 = vmatprep.subr.mxu0 0.0
        %297 = vmatpush2.msra.mxu0 0.0
        %298 = vmatprep.subr.mxu0 0.0
        %299 = vmatpush2.msra.mxu0 0.0
        %300 = vmatprep.subr.mxu0 0.0
        %301 = vmatpush2.msra.mxu0 0.0
        %302 = vmatprep.subr.mxu0 0.0
        %303 = vmatpush2.msra.mxu0 0.0
        %304 = vmatprep.subr.mxu0 0.0
        %305 = vmatpush2.msra.mxu0 0.0
        %306 = vmatprep.mubr.f32.mxu0 0.0
        %307 = vmatmul.mubr.f32.gmra.mxu0 %v231
        %v308 = vpop.f32.mrf.mxu0
        %v309 = vadd.f32 0.0, %v308
        %v310 = vpop.f32.mrf.mxu0
        %311 = vmatprep.mubr.f32.mxu0 0.0
        %312 = vmatmul.mubr.f32.gmra.mxu0 %v234
        %v313 = vpop.f32.mrf.mxu0
        %v314 = vadd.f32 0.0, %v313
        %v315 = vpop.f32.mrf.mxu0
        %316 = vmatprep.mubr.f32.mxu0 0.0
        %317 = vmatmul.mubr.f32.gmra.mxu0 %v237
        %v318 = vpop.f32.mrf.mxu0
        %v319 = vadd.f32 0.0, %v318
        %v320 = vpop.f32.mrf.mxu0
        %321 = vmatprep.mubr.f32.mxu0 0.0
        %322 = vmatmul.mubr.f32.gmra.mxu0 %v240
        %v323 = vpop.f32.mrf.mxu0
        %v324 = vadd.f32 0.0, %v323
        %v325 = vpop.f32.mrf.mxu0
        %326 = vdwg.mxu0
        %v327 = vld [vmem:[%s0] sm:$0xff]
        %v328 = vld [vmem:[%s0 + $0x8] sm:$0xff]
        %329 = vxpose.xlu0.b32.start [1/16] %v309, 128
        %330 = vxpose.xlu0.b32.cont [2/16] 0.0, 128
        %331 = vxpose.xlu0.b32.cont [3/16] 0.0, 128
        %332 = vxpose.xlu0.b32.cont [4/16] 0.0, 128
        %333 = vxpose.xlu0.b32.cont [5/16] 0.0, 128
        %334 = vxpose.xlu0.b32.cont [6/16] 0.0, 128
        %335 = vxpose.xlu0.b32.cont [7/16] 0.0, 128
        %336 = vxpose.xlu0.b32.cont [8/16] 0.0, 128
        %337 = vxpose.xlu0.b32.cont [9/16] 0.0, 128
        %338 = vxpose.xlu0.b32.cont [10/16] 0.0, 128
        %339 = vxpose.xlu0.b32.cont [11/16] 0.0, 128
        %340 = vxpose.xlu0.b32.cont [12/16] 0.0, 128
        %341 = vxpose.xlu0.b32.cont [13/16] 0.0, 128
        %342 = vxpose.xlu0.b32.cont [14/16] 0.0, 128
        %343 = vxpose.xlu0.b32.cont [15/16] 0.0, 128
        %344 = vxpose.xlu0.b32.end [16/16] 0.0, 128
        %v345 = vpop.trf.xlu0
        %v346 = vpop.trf.xlu0
        %v347 = vpop.trf.xlu0
        %v348 = vpop.trf.xlu0
        %v349 = vpop.trf.xlu0
        %v350 = vpop.trf.xlu0
        %v351 = vpop.trf.xlu0
        %v352 = vpop.trf.xlu0
        %v353 = vpop.trf.xlu0
        %v354 = vpop.trf.xlu0
        %v355 = vpop.trf.xlu0
        %v356 = vpop.trf.xlu0
        %v357 = vpop.trf.xlu0
        %v358 = vpop.trf.xlu0
        %v359 = vpop.trf.xlu0
        %v360 = vpop.trf.xlu0
        %361 = vxpose.xlu0.b32.start [1/16] %v314, 128
        %362 = vxpose.xlu0.b32.cont [2/16] 0.0, 128
        %363 = vxpose.xlu0.b32.cont [3/16] 0.0, 128
        %364 = vxpose.xlu0.b32.cont [4/16] 0.0, 128
        %365 = vxpose.xlu0.b32.cont [5/16] 0.0, 128
        %366 = vxpose.xlu0.b32.cont [6/16] 0.0, 128
        %367 = vxpose.xlu0.b32.cont [7/16] 0.0, 128
        %368 = vxpose.xlu0.b32.cont [8/16] 0.0, 128
        %369 = vxpose.xlu0.b32.cont [9/16] 0.0, 128
        %370 = vxpose.xlu0.b32.cont [10/16] 0.0, 128
        %371 = vxpose.xlu0.b32.cont [11/16] 0.0, 128
        %372 = vxpose.xlu0.b32.cont [12/16] 0.0, 128
        %373 = vxpose.xlu0.b32.cont [13/16] 0.0, 128
        %374 = vxpose.xlu0.b32.cont [14/16] 0.0, 128
        %375 = vxpose.xlu0.b32.cont [15/16] 0.0, 128
        %376 = vxpose.xlu0.b32.end [16/16] 0.0, 128
        %v377 = vpop.trf.xlu0
        %v378 = vpop.trf.xlu0
        %v379 = vpop.trf.xlu0
        %v380 = vpop.trf.xlu0
        %v381 = vpop.trf.xlu0
        %v382 = vpop.trf.xlu0
        %v383 = vpop.trf.xlu0
        %v384 = vpop.trf.xlu0
        %v385 = vpop.trf.xlu0
        %v386 = vpop.trf.xlu0
        %v387 = vpop.trf.xlu0
        %v388 = vpop.trf.xlu0
        %v389 = vpop.trf.xlu0
        %v390 = vpop.trf.xlu0
        %v391 = vpop.trf.xlu0
        %v392 = vpop.trf.xlu0
        %393 = vxpose.xlu0.b32.start [1/16] %v319, 128
        %394 = vxpose.xlu0.b32.cont [2/16] 0.0, 128
        %395 = vxpose.xlu0.b32.cont [3/16] 0.0, 128
        %396 = vxpose.xlu0.b32.cont [4/16] 0.0, 128
        %397 = vxpose.xlu0.b32.cont [5/16] 0.0, 128
        %398 = vxpose.xlu0.b32.cont [6/16] 0.0, 128
        %399 = vxpose.xlu0.b32.cont [7/16] 0.0, 128
        %400 = vxpose.xlu0.b32.cont [8/16] 0.0, 128
        %401 = vxpose.xlu0.b32.cont [9/16] 0.0, 128
        %402 = vxpose.xlu0.b32.cont [10/16] 0.0, 128
        %403 = vxpose.xlu0.b32.cont [11/16] 0.0, 128
        %404 = vxpose.xlu0.b32.cont [12/16] 0.0, 128
        %405 = vxpose.xlu0.b32.cont [13/16] 0.0, 128
        %406 = vxpose.xlu0.b32.cont [14/16] 0.0, 128
        %407 = vxpose.xlu0.b32.cont [15/16] 0.0, 128
        %408 = vxpose.xlu0.b32.end [16/16] 0.0, 128
        %v409 = vpop.trf.xlu0
        %v410 = vpop.trf.xlu0
        %v411 = vpop.trf.xlu0
        %v412 = vpop.trf.xlu0
        %v413 = vpop.trf.xlu0
        %v414 = vpop.trf.xlu0
        %v415 = vpop.trf.xlu0
        %v416 = vpop.trf.xlu0
        %v417 = vpop.trf.xlu0
        %v418 = vpop.trf.xlu0
        %v419 = vpop.trf.xlu0
        %v420 = vpop.trf.xlu0
        %v421 = vpop.trf.xlu0
        %v422 = vpop.trf.xlu0
        %v423 = vpop.trf.xlu0
        %v424 = vpop.trf.xlu0
        %425 = vxpose.xlu0.b32.start [1/16] %v324, 128
        %426 = vxpose.xlu0.b32.cont [2/16] 0.0, 128
        %427 = vxpose.xlu0.b32.cont [3/16] 0.0, 128
        %428 = vxpose.xlu0.b32.cont [4/16] 0.0, 128
        %429 = vxpose.xlu0.b32.cont [5/16] 0.0, 128
        %430 = vxpose.xlu0.b32.cont [6/16] 0.0, 128
        %431 = vxpose.xlu0.b32.cont [7/16] 0.0, 128
        %432 = vxpose.xlu0.b32.cont [8/16] 0.0, 128
        %433 = vxpose.xlu0.b32.cont [9/16] 0.0, 128
        %434 = vxpose.xlu0.b32.cont [10/16] 0.0, 128
        %435 = vxpose.xlu0.b32.cont [11/16] 0.0, 128
        %436 = vxpose.xlu0.b32.cont [12/16] 0.0, 128
        %437 = vxpose.xlu0.b32.cont [13/16] 0.0, 128
        %438 = vxpose.xlu0.b32.cont [14/16] 0.0, 128
        %439 = vxpose.xlu0.b32.cont [15/16] 0.0, 128
        %440 = vxpose.xlu0.b32.end [16/16] 0.0, 128
        %v441 = vpop.trf.xlu0
        %v442 = vpop.trf.xlu0
        %v443 = vpop.trf.xlu0
        %v444 = vpop.trf.xlu0
        %v445 = vpop.trf.xlu0
        %v446 = vpop.trf.xlu0
        %v447 = vpop.trf.xlu0
        %v448 = vpop.trf.xlu0
        %v449 = vpop.trf.xlu0
        %v450 = vpop.trf.xlu0
        %v451 = vpop.trf.xlu0
        %v452 = vpop.trf.xlu0
        %v453 = vpop.trf.xlu0
        %v454 = vpop.trf.xlu0
        %v455 = vpop.trf.xlu0
        %v456 = vpop.trf.xlu0
        %v458 = vsel %vm229, %v345, 0
        %v461 = vsel %vm229, %v346, 0
        %v464 = vsel %vm229, %v377, 0
        %v467 = vsel %vm229, %v378, 0
        %v470 = vsel %vm229, %v409, 0
        %v473 = vsel %vm229, %v410, 0
        %v476 = vsel %vm229, %v441, 0
        %v479 = vsel %vm229, %v442, 0
        %v482 = vsel %vm229, %v327, 0
        %v485 = vsel %vm229, %v328, 0
        %487 = vmatprep.subr.mxu0 0.0
        %488 = vmatpush1.xpose.msra.mxu0 0.0
        %489 = vmatprep.subr.mxu0 0.0
        %490 = vmatpush1.xpose.msra.mxu0 0.0
        %491 = vmatprep.subr.mxu0 0.0
        %492 = vmatpush1.xpose.msra.mxu0 0.0
        %493 = vmatprep.subr.mxu0 0.0
        %494 = vmatpush1.xpose.msra.mxu0 0.0
        %495 = vmatprep.subr.mxu0 0.0
        %496 = vmatpush1.xpose.msra.mxu0 0.0
        %497 = vmatprep.subr.mxu0 0.0
        %498 = vmatpush1.xpose.msra.mxu0 0.0
        %499 = vmatprep.subr.mxu0 0.0
        %500 = vmatpush1.xpose.msra.mxu0 0.0
        %501 = vmatprep.subr.mxu0 0.0
        %502 = vmatpush1.xpose.msra.mxu0 0.0
        %503 = vmatprep.subr.mxu0 0.0
        %504 = vmatpush1.xpose.msra.mxu0 0.0
        %505 = vmatprep.subr.mxu0 0.0
        %506 = vmatpush1.xpose.msra.mxu0 0.0
        %507 = vmatprep.subr.mxu0 0.0
        %508 = vmatpush1.xpose.msra.mxu0 0.0
        %509 = vmatprep.subr.mxu0 0.0
        %510 = vmatpush1.xpose.msra.mxu0 0.0
        %511 = vmatprep.subr.mxu0 0.0
        %512 = vmatpush1.xpose.msra.mxu0 0.0
        %513 = vmatprep.subr.mxu0 0.0
        %514 = vmatpush1.xpose.msra.mxu0 0.0
        %515 = vmatprep.subr.mxu0 0.0
        %516 = vmatpush1.xpose.msra.mxu0 %v485
        %517 = vmatprep.subr.mxu0 0.0
        %518 = vmatpush1.xpose.msra.mxu0 %v482
        %519 = vmatprep.subr.mxu0 0.0
        %520 = vmatpush2.xpose.msra.mxu0 0.0
        %521 = vmatprep.subr.mxu0 0.0
        %522 = vmatpush2.xpose.msra.mxu0 0.0
        %523 = vmatprep.subr.mxu0 0.0
        %524 = vmatpush2.xpose.msra.mxu0 0.0
        %525 = vmatprep.subr.mxu0 0.0
        %526 = vmatpush2.xpose.msra.mxu0 0.0
        %527 = vmatprep.subr.mxu0 0.0
        %528 = vmatpush2.xpose.msra.mxu0 0.0
        %529 = vmatprep.subr.mxu0 0.0
        %530 = vmatpush2.xpose.msra.mxu0 0.0
        %531 = vmatprep.subr.mxu0 0.0
        %532 = vmatpush2.xpose.msra.mxu0 0.0
        %533 = vmatprep.subr.mxu0 0.0
        %534 = vmatpush2.xpose.msra.mxu0 0.0
        %535 = vmatprep.subr.mxu0 0.0
        %536 = vmatpush2.xpose.msra.mxu0 0.0
        %537 = vmatprep.subr.mxu0 0.0
        %538 = vmatpush2.xpose.msra.mxu0 0.0
        %539 = vmatprep.subr.mxu0 0.0
        %540 = vmatpush2.xpose.msra.mxu0 0.0
        %541 = vmatprep.subr.mxu0 0.0
        %542 = vmatpush2.xpose.msra.mxu0 0.0
        %543 = vmatprep.subr.mxu0 0.0
        %544 = vmatpush2.xpose.msra.mxu0 0.0
        %545 = vmatprep.subr.mxu0 0.0
        %546 = vmatpush2.xpose.msra.mxu0 0.0
        %547 = vmatprep.subr.mxu0 0.0
        %548 = vmatpush2.xpose.msra.mxu0 0.0
        %549 = vmatprep.subr.mxu0 0.0
        %550 = vmatpush2.xpose.msra.mxu0 0.0
        %551 = vmatprep.mubr.f32.mxu0 0.0
        %552 = vmatmul.mubr.f32.gmra.mxu0 %v458
        %v553 = vpop.f32.mrf.mxu0
        %v554 = vadd.f32 0.0, %v553
        %v555 = vpop.f32.mrf.mxu0
        %556 = vmatprep.mubr.f32.mxu0 0.0
        %557 = vmatmul.mubr.f32.gmra.mxu0 %v461
        %v558 = vpop.f32.mrf.mxu0
        %v559 = vadd.f32 0.0, %v558
        %v560 = vpop.f32.mrf.mxu0
        %561 = vmatprep.mubr.f32.mxu0 0.0
        %562 = vmatmul.mubr.f32.gmra.mxu0 %v464
        %v563 = vpop.f32.mrf.mxu0
        %v564 = vadd.f32 0.0, %v563
        %v565 = vpop.f32.mrf.mxu0
        %566 = vmatprep.mubr.f32.mxu0 0.0
        %567 = vmatmul.mubr.f32.gmra.mxu0 %v467
        %v568 = vpop.f32.mrf.mxu0
        %v569 = vadd.f32 0.0, %v568
        %v570 = vpop.f32.mrf.mxu0
        %571 = vmatprep.mubr.f32.mxu0 0.0
        %572 = vmatmul.mubr.f32.gmra.mxu0 %v470
        %v573 = vpop.f32.mrf.mxu0
        %v574 = vadd.f32 0.0, %v573
        %v575 = vpop.f32.mrf.mxu0
        %576 = vmatprep.mubr.f32.mxu0 0.0
        %577 = vmatmul.mubr.f32.gmra.mxu0 %v473
        %v578 = vpop.f32.mrf.mxu0
        %v579 = vadd.f32 0.0, %v578
        %v580 = vpop.f32.mrf.mxu0
        %581 = vmatprep.mubr.f32.mxu0 0.0
        %582 = vmatmul.mubr.f32.gmra.mxu0 %v476
        %v583 = vpop.f32.mrf.mxu0
        %v584 = vadd.f32 0.0, %v583
        %v585 = vpop.f32.mrf.mxu0
        %586 = vmatprep.mubr.f32.mxu0 0.0
        %587 = vmatmul.mubr.f32.gmra.mxu0 %v479
        %v588 = vpop.f32.mrf.mxu0
        %v589 = vadd.f32 0.0, %v588
        %v590 = vpop.f32.mrf.mxu0
        %591 = vdwg.mxu0
        %592 = vxpose.xlu0.b32.start [1/16] %v554, 128
        %593 = vxpose.xlu0.b32.cont [2/16] %v559, 128
        %594 = vxpose.xlu0.b32.cont [3/16] 0.0, 128
        %595 = vxpose.xlu0.b32.cont [4/16] 0.0, 128
        %596 = vxpose.xlu0.b32.cont [5/16] 0.0, 128
        %597 = vxpose.xlu0.b32.cont [6/16] 0.0, 128
        %598 = vxpose.xlu0.b32.cont [7/16] 0.0, 128
        %599 = vxpose.xlu0.b32.cont [8/16] 0.0, 128
        %600 = vxpose.xlu0.b32.cont [9/16] 0.0, 128
        %601 = vxpose.xlu0.b32.cont [10/16] 0.0, 128
        %602 = vxpose.xlu0.b32.cont [11/16] 0.0, 128
        %603 = vxpose.xlu0.b32.cont [12/16] 0.0, 128
        %604 = vxpose.xlu0.b32.cont [13/16] 0.0, 128
        %605 = vxpose.xlu0.b32.cont [14/16] 0.0, 128
        %606 = vxpose.xlu0.b32.cont [15/16] 0.0, 128
        %607 = vxpose.xlu0.b32.end [16/16] 0.0, 128
        %v608 = vpop.trf.xlu0
        %v609 = vpop.trf.xlu0
        %v610 = vpop.trf.xlu0
        %v611 = vpop.trf.xlu0
        %v612 = vpop.trf.xlu0
        %v613 = vpop.trf.xlu0
        %v614 = vpop.trf.xlu0
        %v615 = vpop.trf.xlu0
        %v616 = vpop.trf.xlu0
        %v617 = vpop.trf.xlu0
        %v618 = vpop.trf.xlu0
        %v619 = vpop.trf.xlu0
        %v620 = vpop.trf.xlu0
        %v621 = vpop.trf.xlu0
        %v622 = vpop.trf.xlu0
        %v623 = vpop.trf.xlu0
        %624 = vxpose.xlu0.b32.start [1/16] %v564, 128
        %625 = vxpose.xlu0.b32.cont [2/16] %v569, 128
        %626 = vxpose.xlu0.b32.cont [3/16] 0.0, 128
        %627 = vxpose.xlu0.b32.cont [4/16] 0.0, 128
        %628 = vxpose.xlu0.b32.cont [5/16] 0.0, 128
        %629 = vxpose.xlu0.b32.cont [6/16] 0.0, 128
        %630 = vxpose.xlu0.b32.cont [7/16] 0.0, 128
        %631 = vxpose.xlu0.b32.cont [8/16] 0.0, 128
        %632 = vxpose.xlu0.b32.cont [9/16] 0.0, 128
        %633 = vxpose.xlu0.b32.cont [10/16] 0.0, 128
        %634 = vxpose.xlu0.b32.cont [11/16] 0.0, 128
        %635 = vxpose.xlu0.b32.cont [12/16] 0.0, 128
        %636 = vxpose.xlu0.b32.cont [13/16] 0.0, 128
        %637 = vxpose.xlu0.b32.cont [14/16] 0.0, 128
        %638 = vxpose.xlu0.b32.cont [15/16] 0.0, 128
        %639 = vxpose.xlu0.b32.end [16/16] 0.0, 128
        %v640 = vpop.trf.xlu0
        %v641 = vpop.trf.xlu0
        %v642 = vpop.trf.xlu0
        %v643 = vpop.trf.xlu0
        %v644 = vpop.trf.xlu0
        %v645 = vpop.trf.xlu0
        %v646 = vpop.trf.xlu0
        %v647 = vpop.trf.xlu0
        %v648 = vpop.trf.xlu0
        %v649 = vpop.trf.xlu0
        %v650 = vpop.trf.xlu0
        %v651 = vpop.trf.xlu0
        %v652 = vpop.trf.xlu0
        %v653 = vpop.trf.xlu0
        %v654 = vpop.trf.xlu0
        %v655 = vpop.trf.xlu0
        %656 = vxpose.xlu0.b32.start [1/16] %v574, 128
        %657 = vxpose.xlu0.b32.cont [2/16] %v579, 128
        %658 = vxpose.xlu0.b32.cont [3/16] 0.0, 128
        %659 = vxpose.xlu0.b32.cont [4/16] 0.0, 128
        %660 = vxpose.xlu0.b32.cont [5/16] 0.0, 128
        %661 = vxpose.xlu0.b32.cont [6/16] 0.0, 128
        %662 = vxpose.xlu0.b32.cont [7/16] 0.0, 128
        %663 = vxpose.xlu0.b32.cont [8/16] 0.0, 128
        %664 = vxpose.xlu0.b32.cont [9/16] 0.0, 128
        %665 = vxpose.xlu0.b32.cont [10/16] 0.0, 128
        %666 = vxpose.xlu0.b32.cont [11/16] 0.0, 128
        %667 = vxpose.xlu0.b32.cont [12/16] 0.0, 128
        %668 = vxpose.xlu0.b32.cont [13/16] 0.0, 128
        %669 = vxpose.xlu0.b32.cont [14/16] 0.0, 128
        %670 = vxpose.xlu0.b32.cont [15/16] 0.0, 128
        %671 = vxpose.xlu0.b32.end [16/16] 0.0, 128
        %v672 = vpop.trf.xlu0
        %v673 = vpop.trf.xlu0
        %v674 = vpop.trf.xlu0
        %v675 = vpop.trf.xlu0
        %v676 = vpop.trf.xlu0
        %v677 = vpop.trf.xlu0
        %v678 = vpop.trf.xlu0
        %v679 = vpop.trf.xlu0
        %v680 = vpop.trf.xlu0
        %v681 = vpop.trf.xlu0
        %v682 = vpop.trf.xlu0
        %v683 = vpop.trf.xlu0
        %v684 = vpop.trf.xlu0
        %v685 = vpop.trf.xlu0
        %v686 = vpop.trf.xlu0
        %v687 = vpop.trf.xlu0
        %688 = vxpose.xlu0.b32.start [1/16] %v584, 128
        %689 = vxpose.xlu0.b32.cont [2/16] %v589, 128
        %690 = vxpose.xlu0.b32.cont [3/16] 0.0, 128
        %691 = vxpose.xlu0.b32.cont [4/16] 0.0, 128
        %692 = vxpose.xlu0.b32.cont [5/16] 0.0, 128
        %693 = vxpose.xlu0.b32.cont [6/16] 0.0, 128
        %694 = vxpose.xlu0.b32.cont [7/16] 0.0, 128
        %695 = vxpose.xlu0.b32.cont [8/16] 0.0, 128
        %696 = vxpose.xlu0.b32.cont [9/16] 0.0, 128
        %697 = vxpose.xlu0.b32.cont [10/16] 0.0, 128
        %698 = vxpose.xlu0.b32.cont [11/16] 0.0, 128
        %699 = vxpose.xlu0.b32.cont [12/16] 0.0, 128
        %700 = vxpose.xlu0.b32.cont [13/16] 0.0, 128
        %701 = vxpose.xlu0.b32.cont [14/16] 0.0, 128
        %702 = vxpose.xlu0.b32.cont [15/16] 0.0, 128
        %703 = vxpose.xlu0.b32.end [16/16] 0.0, 128
        %v704 = vpop.trf.xlu0
        %v705 = vpop.trf.xlu0
        %v706 = vpop.trf.xlu0
        %v707 = vpop.trf.xlu0
        %v708 = vpop.trf.xlu0
        %v709 = vpop.trf.xlu0
        %v710 = vpop.trf.xlu0
        %v711 = vpop.trf.xlu0
        %v712 = vpop.trf.xlu0
        %v713 = vpop.trf.xlu0
        %v714 = vpop.trf.xlu0
        %v715 = vpop.trf.xlu0
        %v716 = vpop.trf.xlu0
        %v717 = vpop.trf.xlu0
        %v718 = vpop.trf.xlu0
        %v719 = vpop.trf.xlu0
        %vm720 = vcmask 130048
        %721 = vst.msk [vmem:[#allocation2] sm:$0xff] %vm720, 0.0
        %722 = vst.msk [vmem:[#allocation2 + $0x8] sm:$0xff] %vm720, 0.0
        %723 = vst.msk [vmem:[#allocation2 + $0x10] sm:$0xff] %vm720, 0.0
        %724 = vst.msk [vmem:[#allocation2 + $0x18] sm:$0xff] %vm720, 0.0
        %725 = vst.msk [vmem:[#allocation2 + $0x20] sm:$0xff] %vm720, 0.0
        %726 = vst.msk [vmem:[#allocation2 + $0x28] sm:$0xff] %vm720, 0.0
        %727 = vst.msk [vmem:[#allocation2 + $0x30] sm:$0xff] %vm720, 0.0
        %728 = vst.msk [vmem:[#allocation2 + $0x38] sm:$0xff] %vm720, 0.0
        %729 = vst.msk [vmem:[#allocation2 + $0x40] sm:$0xff] %vm720, 0.0
        %730 = vst.msk [vmem:[#allocation2 + $0x48] sm:$0xff] %vm720, 0.0
        %731 = vst.msk [vmem:[#allocation2 + $0x50] sm:$0xff] %vm720, 0.0
        %732 = vst.msk [vmem:[#allocation2 + $0x58] sm:$0xff] %vm720, 0.0
        %733 = vst.msk [vmem:[#allocation2 + $0x60] sm:$0xff] %vm720, 0.0
        %734 = vst.msk [vmem:[#allocation2 + $0x68] sm:$0xff] %vm720, 0.0
        %735 = vst.msk [vmem:[#allocation2 + $0x70] sm:$0xff] %vm720, 0.0
        %736 = vst.msk [vmem:[#allocation2 + $0x78] sm:$0xff] %vm720, 0.0
        %737 = vst.msk [vmem:[#allocation2 + $0x80] sm:$0xff] %vm720, 0.0
        %738 = vst.msk [vmem:[#allocation2 + $0x88] sm:$0xff] %vm720, 0.0
        %739 = vst.msk [vmem:[#allocation2 + $0x90] sm:$0xff] %vm720, 0.0
        %740 = vst.msk [vmem:[#allocation2 + $0x98] sm:$0xff] %vm720, 0.0
        %741 = vst.msk [vmem:[#allocation2 + $0xa0] sm:$0xff] %vm720, 0.0
        %742 = vst.msk [vmem:[#allocation2 + $0xa8] sm:$0xff] %vm720, 0.0
        %743 = vst.msk [vmem:[#allocation2 + $0xb0] sm:$0xff] %vm720, 0.0
        %744 = vst.msk [vmem:[#allocation2 + $0xb8] sm:$0xff] %vm720, 0.0
        %745 = vst.msk [vmem:[#allocation2 + $0xc0] sm:$0xff] %vm720, 0.0
        %746 = vst.msk [vmem:[#allocation2 + $0xc8] sm:$0xff] %vm720, 0.0
        %747 = vst.msk [vmem:[#allocation2 + $0xd0] sm:$0xff] %vm720, 0.0
        %748 = vst.msk [vmem:[#allocation2 + $0xd8] sm:$0xff] %vm720, 0.0
        %749 = vst.msk [vmem:[#allocation2 + $0xe0] sm:$0xff] %vm720, 0.0
        %750 = vst.msk [vmem:[#allocation2 + $0xe8] sm:$0xff] %vm720, 0.0
        %751 = vst.msk [vmem:[#allocation2 + $0xf0] sm:$0xff] %vm720, 0.0
        %752 = vst.msk [vmem:[#allocation2 + $0xf8] sm:$0xff] %vm720, 0.0
        %753 = vst.msk [vmem:[#allocation2 + $0x100] sm:$0xff] %vm720, 0.0
        %754 = vst.msk [vmem:[#allocation2 + $0x108] sm:$0xff] %vm720, 0.0
        %755 = vst.msk [vmem:[#allocation2 + $0x110] sm:$0xff] %vm720, 0.0
        %756 = vst.msk [vmem:[#allocation2 + $0x118] sm:$0xff] %vm720, 0.0
        %757 = vst.msk [vmem:[#allocation2 + $0x120] sm:$0xff] %vm720, 0.0
        %758 = vst.msk [vmem:[#allocation2 + $0x128] sm:$0xff] %vm720, 0.0
        %759 = vst.msk [vmem:[#allocation2 + $0x130] sm:$0xff] %vm720, 0.0
        %760 = vst.msk [vmem:[#allocation2 + $0x138] sm:$0xff] %vm720, 0.0
        %761 = vst.msk [vmem:[#allocation2 + $0x140] sm:$0xff] %vm720, 0.0
        %762 = vst.msk [vmem:[#allocation2 + $0x148] sm:$0xff] %vm720, 0.0
        %763 = vst.msk [vmem:[#allocation2 + $0x150] sm:$0xff] %vm720, 0.0
        %764 = vst.msk [vmem:[#allocation2 + $0x158] sm:$0xff] %vm720, 0.0
        %765 = vst.msk [vmem:[#allocation2 + $0x160] sm:$0xff] %vm720, 0.0
        %766 = vst.msk [vmem:[#allocation2 + $0x168] sm:$0xff] %vm720, 0.0
        %767 = vst.msk [vmem:[#allocation2 + $0x170] sm:$0xff] %vm720, 0.0
        %768 = vst.msk [vmem:[#allocation2 + $0x178] sm:$0xff] %vm720, 0.0
        %769 = vst.msk [vmem:[#allocation2 + $0x180] sm:$0xff] %vm720, 0.0
        %770 = vst.msk [vmem:[#allocation2 + $0x188] sm:$0xff] %vm720, 0.0
        %771 = vst.msk [vmem:[#allocation2 + $0x190] sm:$0xff] %vm720, 0.0
        %772 = vst.msk [vmem:[#allocation2 + $0x198] sm:$0xff] %vm720, 0.0
        %773 = vst.msk [vmem:[#allocation2 + $0x1a0] sm:$0xff] %vm720, 0.0
        %774 = vst.msk [vmem:[#allocation2 + $0x1a8] sm:$0xff] %vm720, 0.0
        %775 = vst.msk [vmem:[#allocation2 + $0x1b0] sm:$0xff] %vm720, 0.0
        %776 = vst.msk [vmem:[#allocation2 + $0x1b8] sm:$0xff] %vm720, 0.0
        %777 = vst.msk [vmem:[#allocation2 + $0x1c0] sm:$0xff] %vm720, 0.0
        %778 = vst.msk [vmem:[#allocation2 + $0x1c8] sm:$0xff] %vm720, 0.0
        %779 = vst.msk [vmem:[#allocation2 + $0x1d0] sm:$0xff] %vm720, 0.0
        %780 = vst.msk [vmem:[#allocation2 + $0x1d8] sm:$0xff] %vm720, 0.0
        %781 = vst.msk [vmem:[#allocation2 + $0x1e0] sm:$0xff] %vm720, 0.0
        %782 = vst.msk [vmem:[#allocation2 + $0x1e8] sm:$0xff] %vm720, 0.0
        %783 = vst.msk [vmem:[#allocation2 + $0x1f0] sm:$0xff] %vm720, 0.0
        %784 = vst.msk [vmem:[#allocation2 + $0x1f8] sm:$0xff] %vm720, 0.0
        %785 = vst.msk [vmem:[#allocation2 + $0x200] sm:$0xff] %vm720, 0.0
        %786 = vst.msk [vmem:[#allocation2 + $0x208] sm:$0xff] %vm720, 0.0
        %787 = vst.msk [vmem:[#allocation2 + $0x210] sm:$0xff] %vm720, 0.0
        %788 = vst.msk [vmem:[#allocation2 + $0x218] sm:$0xff] %vm720, 0.0
        %789 = vst.msk [vmem:[#allocation2 + $0x220] sm:$0xff] %vm720, 0.0
        %790 = vst.msk [vmem:[#allocation2 + $0x228] sm:$0xff] %vm720, 0.0
        %791 = vst.msk [vmem:[#allocation2 + $0x230] sm:$0xff] %vm720, 0.0
        %792 = vst.msk [vmem:[#allocation2 + $0x238] sm:$0xff] %vm720, 0.0
        %801 = vrot.lane.b32.xlu0 %v608, 1
        %v802 = vpop.permute.xlu0 %801
        %803 = vrot.lane.b32.xlu0 %v609, 1
        %v804 = vpop.permute.xlu0 %803
        %805 = vrot.lane.b32.xlu0 %v640, 1
        %v806 = vpop.permute.xlu0 %805
        %807 = vrot.lane.b32.xlu0 %v641, 1
        %v808 = vpop.permute.xlu0 %807
        %809 = vrot.lane.b32.xlu0 %v672, 1
        %v810 = vpop.permute.xlu0 %809
        %811 = vrot.lane.b32.xlu0 %v673, 1
        %v812 = vpop.permute.xlu0 %811
        %813 = vrot.lane.b32.xlu0 %v704, 1
        %v814 = vpop.permute.xlu0 %813
        %815 = vrot.lane.b32.xlu0 %v705, 1
        %v816 = vpop.permute.xlu0 %815
        %vm825 = vcmask 130056
        %826 = vst.msk [vmem:[#allocation2 + $0x1] sm:$0xff] %vm825, %v802
        %vm827 = vcmask 129032
        %828 = vst.msk [vmem:[#allocation2 + $0x9] sm:$0x7f] %vm827, %v804
        %829 = vst.msk [vmem:[#allocation2 + $0x11] sm:$0xff] %vm825, %v806
        %830 = vst.msk [vmem:[#allocation2 + $0x19] sm:$0x7f] %vm827, %v808
        %831 = vst.msk [vmem:[#allocation2 + $0x21] sm:$0xff] %vm825, %v810
        %832 = vst.msk [vmem:[#allocation2 + $0x29] sm:$0x7f] %vm827, %v812
        %833 = vst.msk [vmem:[#allocation2 + $0x31] sm:$0xff] %vm825, %v814
        %834 = vst.msk [vmem:[#allocation2 + $0x39] sm:$0x7f] %vm827, %v816
        %s835 = scalar_lea.vmem [#allocation2], 64
        %836 = vst.msk [vmem:[%s835 + $0x1] sm:$0xff] %vm720, %v608
        %vm837 = vcmask 129024
        %838 = vst.msk [vmem:[%s835 + $0x9] sm:$0x7f] %vm837, %v609
        %839 = vst.msk [vmem:[%s835 + $0x11] sm:$0xff] %vm720, %v640
        %840 = vst.msk [vmem:[%s835 + $0x19] sm:$0x7f] %vm837, %v641
        %841 = vst.msk [vmem:[%s835 + $0x21] sm:$0xff] %vm720, %v672
        %842 = vst.msk [vmem:[%s835 + $0x29] sm:$0x7f] %vm837, %v673
        %843 = vst.msk [vmem:[%s835 + $0x31] sm:$0xff] %vm720, %v704
        %844 = vst.msk [vmem:[%s835 + $0x39] sm:$0x7f] %vm837, %v705
        %845 = vrot.lane.b32.xlu0 %v608, 127
        %v846 = vpop.permute.xlu0 %845
        %847 = vrot.lane.b32.xlu0 %v609, 127
        %v848 = vpop.permute.xlu0 %847
        %849 = vrot.lane.b32.xlu0 %v640, 127
        %v850 = vpop.permute.xlu0 %849
        %851 = vrot.lane.b32.xlu0 %v641, 127
        %v852 = vpop.permute.xlu0 %851
        %853 = vrot.lane.b32.xlu0 %v672, 127
        %v854 = vpop.permute.xlu0 %853
        %855 = vrot.lane.b32.xlu0 %v673, 127
        %v856 = vpop.permute.xlu0 %855
        %857 = vrot.lane.b32.xlu0 %v704, 127
        %v858 = vpop.permute.xlu0 %857
        %859 = vrot.lane.b32.xlu0 %v705, 127
        %v860 = vpop.permute.xlu0 %859
        %s869 = scalar_lea.vmem [#allocation2], 128
        %vm870 = vcmask 121856
        %871 = vst.msk [vmem:[%s869 + $0x1] sm:$0xff] %vm870, %v846
        %vm872 = vcmask 120832
        %873 = vst.msk [vmem:[%s869 + $0x9] sm:$0x7f] %vm872, %v848
        %874 = vst.msk [vmem:[%s869 + $0x11] sm:$0xff] %vm870, %v850
        %875 = vst.msk [vmem:[%s869 + $0x19] sm:$0x7f] %vm872, %v852
        %876 = vst.msk [vmem:[%s869 + $0x21] sm:$0xff] %vm870, %v854
        %877 = vst.msk [vmem:[%s869 + $0x29] sm:$0x7f] %vm872, %v856
        %878 = vst.msk [vmem:[%s869 + $0x31] sm:$0xff] %vm870, %v858
        %879 = vst.msk [vmem:[%s869 + $0x39] sm:$0x7f] %vm872, %v860
        %s880 = scalar_lea.vmem [#allocation2], 192
        %881 = vst.msk [vmem:[%s880] sm:$0xff] %vm825, %v802
        %882 = vst.msk [vmem:[%s880 + $0x8] sm:$0xff] %vm825, %v804
        %883 = vst.msk [vmem:[%s880 + $0x10] sm:$0xff] %vm825, %v806
        %884 = vst.msk [vmem:[%s880 + $0x18] sm:$0xff] %vm825, %v808
        %885 = vst.msk [vmem:[%s880 + $0x20] sm:$0xff] %vm825, %v810
        %886 = vst.msk [vmem:[%s880 + $0x28] sm:$0xff] %vm825, %v812
        %887 = vst.msk [vmem:[%s880 + $0x30] sm:$0xff] %vm825, %v814
        %888 = vst.msk [vmem:[%s880 + $0x38] sm:$0xff] %vm825, %v816
        %s889 = scalar_lea.vmem [#allocation2], 256
        %890 = vst.msk [vmem:[%s889] sm:$0xff] %vm720, %v608
        %891 = vst.msk [vmem:[%s889 + $0x8] sm:$0xff] %vm720, %v609
        %892 = vst.msk [vmem:[%s889 + $0x10] sm:$0xff] %vm720, %v640
        %893 = vst.msk [vmem:[%s889 + $0x18] sm:$0xff] %vm720, %v641
        %894 = vst.msk [vmem:[%s889 + $0x20] sm:$0xff] %vm720, %v672
        %895 = vst.msk [vmem:[%s889 + $0x28] sm:$0xff] %vm720, %v673
        %896 = vst.msk [vmem:[%s889 + $0x30] sm:$0xff] %vm720, %v704
        %897 = vst.msk [vmem:[%s889 + $0x38] sm:$0xff] %vm720, %v705
        %s898 = scalar_lea.vmem [#allocation2], 320
        %899 = vst.msk [vmem:[%s898] sm:$0xff] %vm870, %v846
        %900 = vst.msk [vmem:[%s898 + $0x8] sm:$0xff] %vm870, %v848
        %901 = vst.msk [vmem:[%s898 + $0x10] sm:$0xff] %vm870, %v850
        %902 = vst.msk [vmem:[%s898 + $0x18] sm:$0xff] %vm870, %v852
        %903 = vst.msk [vmem:[%s898 + $0x20] sm:$0xff] %vm870, %v854
        %904 = vst.msk [vmem:[%s898 + $0x28] sm:$0xff] %vm870, %v856
        %905 = vst.msk [vmem:[%s898 + $0x30] sm:$0xff] %vm870, %v858
        %906 = vst.msk [vmem:[%s898 + $0x38] sm:$0xff] %vm870, %v860
        %s907 = scalar_lea.vmem [#allocation2], 384
        %vm908 = vcmask 130057
        %909 = vst.msk [vmem:[%s907 - $0x1] sm:$0xfe] %vm908, %v802
        %910 = vst.msk [vmem:[%s907 + $0x7] sm:$0xff] %vm825, %v804
        %911 = vst.msk [vmem:[%s907 + $0xf] sm:$0xfe] %vm908, %v806
        %912 = vst.msk [vmem:[%s907 + $0x17] sm:$0xff] %vm825, %v808
        %913 = vst.msk [vmem:[%s907 + $0x1f] sm:$0xfe] %vm908, %v810
        %914 = vst.msk [vmem:[%s907 + $0x27] sm:$0xff] %vm825, %v812
        %915 = vst.msk [vmem:[%s907 + $0x2f] sm:$0xfe] %vm908, %v814
        %916 = vst.msk [vmem:[%s907 + $0x37] sm:$0xff] %vm825, %v816
        %s917 = scalar_lea.vmem [#allocation2], 448
        %vm918 = vcmask 130049
        %919 = vst.msk [vmem:[%s917 - $0x1] sm:$0xfe] %vm918, %v608
        %920 = vst.msk [vmem:[%s917 + $0x7] sm:$0xff] %vm720, %v609
        %921 = vst.msk [vmem:[%s917 + $0xf] sm:$0xfe] %vm918, %v640
        %922 = vst.msk [vmem:[%s917 + $0x17] sm:$0xff] %vm720, %v641
        %923 = vst.msk [vmem:[%s917 + $0x1f] sm:$0xfe] %vm918, %v672
        %924 = vst.msk [vmem:[%s917 + $0x27] sm:$0xff] %vm720, %v673
        %925 = vst.msk [vmem:[%s917 + $0x2f] sm:$0xfe] %vm918, %v704
        %926 = vst.msk [vmem:[%s917 + $0x37] sm:$0xff] %vm720, %v705
        %s927 = scalar_lea.vmem [#allocation2], 512
        %vm928 = vcmask 121857
        %929 = vst.msk [vmem:[%s927 - $0x1] sm:$0xfe] %vm928, %v846
        %930 = vst.msk [vmem:[%s927 + $0x7] sm:$0xff] %vm870, %v848
        %931 = vst.msk [vmem:[%s927 + $0xf] sm:$0xfe] %vm928, %v850
        %932 = vst.msk [vmem:[%s927 + $0x17] sm:$0xff] %vm870, %v852
        %933 = vst.msk [vmem:[%s927 + $0x1f] sm:$0xfe] %vm928, %v854
        %934 = vst.msk [vmem:[%s927 + $0x27] sm:$0xff] %vm870, %v856
        %935 = vst.msk [vmem:[%s927 + $0x2f] sm:$0xfe] %vm928, %v858
        %936 = vst.msk [vmem:[%s927 + $0x37] sm:$0xff] %vm870, %v860
        %v937 = vld [vmem:[%s2] sm:$0xf]
        %v938 = vld [vmem:[#allocation2] sm:$0xff]
        %v939 = vld [vmem:[#allocation2 + $0x8] sm:$0xff]
        %v940 = vld [vmem:[#allocation2 + $0x10] sm:$0xff]
        %v941 = vld [vmem:[#allocation2 + $0x18] sm:$0xff]
        %v942 = vld [vmem:[#allocation2 + $0x20] sm:$0xff]
        %v943 = vld [vmem:[#allocation2 + $0x28] sm:$0xff]
        %v944 = vld [vmem:[#allocation2 + $0x30] sm:$0xff]
        %v945 = vld [vmem:[#allocation2 + $0x38] sm:$0xff]
        %v946 = vld [vmem:[#allocation2 + $0x40] sm:$0xff]
        %v947 = vld [vmem:[#allocation2 + $0x48] sm:$0xff]
        %v948 = vld [vmem:[#allocation2 + $0x50] sm:$0xff]
        %v949 = vld [vmem:[#allocation2 + $0x58] sm:$0xff]
        %v950 = vld [vmem:[#allocation2 + $0x60] sm:$0xff]
        %v951 = vld [vmem:[#allocation2 + $0x68] sm:$0xff]
        %v952 = vld [vmem:[#allocation2 + $0x70] sm:$0xff]
        %v953 = vld [vmem:[#allocation2 + $0x78] sm:$0xff]
        %v954 = vld [vmem:[#allocation2 + $0x80] sm:$0xff]
        %v955 = vld [vmem:[#allocation2 + $0x88] sm:$0xff]
        %v956 = vld [vmem:[#allocation2 + $0x90] sm:$0xff]
        %v957 = vld [vmem:[#allocation2 + $0x98] sm:$0xff]
        %v958 = vld [vmem:[#allocation2 + $0xa0] sm:$0xff]
        %v959 = vld [vmem:[#allocation2 + $0xa8] sm:$0xff]
        %v960 = vld [vmem:[#allocation2 + $0xb0] sm:$0xff]
        %v961 = vld [vmem:[#allocation2 + $0xb8] sm:$0xff]
        %v962 = vld [vmem:[#allocation2 + $0xc0] sm:$0xff]
        %v963 = vld [vmem:[#allocation2 + $0xc8] sm:$0xff]
        %v964 = vld [vmem:[#allocation2 + $0xd0] sm:$0xff]
        %v965 = vld [vmem:[#allocation2 + $0xd8] sm:$0xff]
        %v966 = vld [vmem:[#allocation2 + $0xe0] sm:$0xff]
        %v967 = vld [vmem:[#allocation2 + $0xe8] sm:$0xff]
        %v968 = vld [vmem:[#allocation2 + $0xf0] sm:$0xff]
        %v969 = vld [vmem:[#allocation2 + $0xf8] sm:$0xff]
        %v970 = vld [vmem:[#allocation2 + $0x100] sm:$0xff]
        %v971 = vld [vmem:[#allocation2 + $0x108] sm:$0xff]
        %v972 = vld [vmem:[#allocation2 + $0x110] sm:$0xff]
        %v973 = vld [vmem:[#allocation2 + $0x118] sm:$0xff]
        %v974 = vld [vmem:[#allocation2 + $0x120] sm:$0xff]
        %v975 = vld [vmem:[#allocation2 + $0x128] sm:$0xff]
        %v976 = vld [vmem:[#allocation2 + $0x130] sm:$0xff]
        %v977 = vld [vmem:[#allocation2 + $0x138] sm:$0xff]
        %v978 = vld [vmem:[#allocation2 + $0x140] sm:$0xff]
        %v979 = vld [vmem:[#allocation2 + $0x148] sm:$0xff]
        %v980 = vld [vmem:[#allocation2 + $0x150] sm:$0xff]
        %v981 = vld [vmem:[#allocation2 + $0x158] sm:$0xff]
        %v982 = vld [vmem:[#allocation2 + $0x160] sm:$0xff]
        %v983 = vld [vmem:[#allocation2 + $0x168] sm:$0xff]
        %v984 = vld [vmem:[#allocation2 + $0x170] sm:$0xff]
        %v985 = vld [vmem:[#allocation2 + $0x178] sm:$0xff]
        %v986 = vld [vmem:[#allocation2 + $0x180] sm:$0xff]
        %v987 = vld [vmem:[#allocation2 + $0x188] sm:$0xff]
        %v988 = vld [vmem:[#allocation2 + $0x190] sm:$0xff]
        %v989 = vld [vmem:[#allocation2 + $0x198] sm:$0xff]
        %v990 = vld [vmem:[#allocation2 + $0x1a0] sm:$0xff]
        %v991 = vld [vmem:[#allocation2 + $0x1a8] sm:$0xff]
        %v992 = vld [vmem:[#allocation2 + $0x1b0] sm:$0xff]
        %v993 = vld [vmem:[#allocation2 + $0x1b8] sm:$0xff]
        %v994 = vld [vmem:[#allocation2 + $0x1c0] sm:$0xff]
        %v995 = vld [vmem:[#allocation2 + $0x1c8] sm:$0xff]
        %v996 = vld [vmem:[#allocation2 + $0x1d0] sm:$0xff]
        %v997 = vld [vmem:[#allocation2 + $0x1d8] sm:$0xff]
        %v998 = vld [vmem:[#allocation2 + $0x1e0] sm:$0xff]
        %v999 = vld [vmem:[#allocation2 + $0x1e8] sm:$0xff]
        %v1000 = vld [vmem:[#allocation2 + $0x1f0] sm:$0xff]
        %v1001 = vld [vmem:[#allocation2 + $0x1f8] sm:$0xff]
        %v1002 = vld [vmem:[#allocation2 + $0x200] sm:$0xff]
        %v1003 = vld [vmem:[#allocation2 + $0x208] sm:$0xff]
        %v1004 = vld [vmem:[#allocation2 + $0x210] sm:$0xff]
        %v1005 = vld [vmem:[#allocation2 + $0x218] sm:$0xff]
        %v1006 = vld [vmem:[#allocation2 + $0x220] sm:$0xff]
        %v1007 = vld [vmem:[#allocation2 + $0x228] sm:$0xff]
        %v1008 = vld [vmem:[#allocation2 + $0x230] sm:$0xff]
        %v1009 = vld [vmem:[#allocation2 + $0x238] sm:$0xff]
        %v1010 = vpack.c.bf16 %v939, %v938
        %v1011 = vpack.c.bf16 %v941, %v940
        %v1012 = vpack.c.bf16 %v943, %v942
        %v1013 = vpack.c.bf16 %v945, %v944
        %v1014 = vpack.c.bf16 %v947, %v946
        %v1015 = vpack.c.bf16 %v949, %v948
        %v1016 = vpack.c.bf16 %v951, %v950
        %v1017 = vpack.c.bf16 %v953, %v952
        %v1018 = vpack.c.bf16 %v955, %v954
        %v1019 = vpack.c.bf16 %v957, %v956
        %v1020 = vpack.c.bf16 %v959, %v958
        %v1021 = vpack.c.bf16 %v961, %v960
        %v1022 = vpack.c.bf16 %v963, %v962
        %v1023 = vpack.c.bf16 %v965, %v964
        %v1024 = vpack.c.bf16 %v967, %v966
        %v1025 = vpack.c.bf16 %v969, %v968
        %v1026 = vpack.c.bf16 %v971, %v970
        %v1027 = vpack.c.bf16 %v973, %v972
        %v1028 = vpack.c.bf16 %v975, %v974
        %v1029 = vpack.c.bf16 %v977, %v976
        %v1030 = vpack.c.bf16 %v979, %v978
        %v1031 = vpack.c.bf16 %v981, %v980
        %v1032 = vpack.c.bf16 %v983, %v982
        %v1033 = vpack.c.bf16 %v985, %v984
        %v1034 = vpack.c.bf16 %v987, %v986
        %v1035 = vpack.c.bf16 %v989, %v988
        %v1036 = vpack.c.bf16 %v991, %v990
        %v1037 = vpack.c.bf16 %v993, %v992
        %v1038 = vpack.c.bf16 %v995, %v994
        %v1039 = vpack.c.bf16 %v997, %v996
        %v1040 = vpack.c.bf16 %v999, %v998
        %v1041 = vpack.c.bf16 %v1001, %v1000
        %v1042 = vpack.c.bf16 %v1003, %v1002
        %v1043 = vpack.c.bf16 %v1005, %v1004
        %v1044 = vpack.c.bf16 %v1007, %v1006
        %v1045 = vpack.c.bf16 %v1009, %v1008
        %v1046 = vld [vmem:[%s3] sm:$0xff]
        %v1048 = vcombine.high %v1046, %v1046
        %v1050 = vunpack.c.l.s4 1966171168
        %v1051 = vunpack.c.0.s8 %v1050
        %v1052 = vlaneseq
        %v1053 = vshrl.u32 %v1052, 7
        %v1054 = vsub.s32 %v1051, %v1053
        %v1055 = vrot.slane %v1046, %v1054
        %v1057 = vunpack.c.l.s4 1966171168
        %v1058 = vunpack.c.0.s8 %v1057
        %v1059 = vlaneseq
        %v1060 = vshrl.u32 %v1059, 7
        %v1061 = vsub.s32 %v1058, %v1060
        %v1062 = vrot.slane %v1048, %v1061
        %v1063 = vcombine.high %v1055, %v1055
        %v1064 = vcombine.high %v1062, %v1062
        %v1066 = vunpack.c.l.s4 1966171168
        %v1067 = vunpack.c.0.s8 %v1066
        %v1068 = vlaneseq
        %v1069 = vshrl.u32 %v1068, 7
        %v1070 = vsub.s32 %v1067, %v1069
        %v1071 = vrot.slane %v1055, %v1070
        %v1073 = vunpack.c.l.s4 1966171168
        %v1074 = vunpack.c.0.s8 %v1073
        %v1075 = vlaneseq
        %v1076 = vshrl.u32 %v1075, 7
        %v1077 = vsub.s32 %v1074, %v1076
        %v1078 = vrot.slane %v1062, %v1077
        %v1080 = vunpack.c.l.s4 1966171168
        %v1081 = vunpack.c.0.s8 %v1080
        %v1082 = vlaneseq
        %v1083 = vshrl.u32 %v1082, 7
        %v1084 = vsub.s32 %v1081, %v1083
        %v1085 = vrot.slane %v1063, %v1084
        %v1087 = vunpack.c.l.s4 1966171168
        %v1088 = vunpack.c.0.s8 %v1087
        %v1089 = vlaneseq
        %v1090 = vshrl.u32 %v1089, 7
        %v1091 = vsub.s32 %v1088, %v1090
        %v1092 = vrot.slane %v1064, %v1091
        %v1093 = vcombine.high %v1071, %v1071
        %v1094 = vcombine.high %v1078, %v1078
        %v1095 = vcombine.high %v1085, %v1085
        %v1096 = vcombine.high %v1092, %v1092
        %v1097 = vlaneseq
        %v1098 = vshrl.u32 %v1097, 7
        %v1099 = vsub.s32 0, %v1098
        %v1100 = vrot.slane %v1071, %v1099
        %v1101 = vlaneseq
        %v1102 = vshrl.u32 %v1101, 7
        %v1103 = vsub.s32 0, %v1102
        %v1104 = vrot.slane %v1085, %v1103
        %v1105 = vlaneseq
        %v1106 = vshrl.u32 %v1105, 7
        %v1107 = vsub.s32 0, %v1106
        %v1108 = vrot.slane %v1093, %v1107
        %v1109 = vlaneseq
        %v1110 = vshrl.u32 %v1109, 7
        %v1111 = vsub.s32 0, %v1110
        %v1112 = vrot.slane %v1095, %v1111
        %v1113 = vlaneseq
        %v1114 = vshrl.u32 %v1113, 7
        %v1115 = vsub.s32 0, %v1114
        %v1116 = vrot.slane %v1078, %v1115
        %v1117 = vlaneseq
        %v1118 = vshrl.u32 %v1117, 7
        %v1119 = vsub.s32 0, %v1118
        %v1120 = vrot.slane %v1092, %v1119
        %v1121 = vlaneseq
        %v1122 = vshrl.u32 %v1121, 7
        %v1123 = vsub.s32 0, %v1122
        %v1124 = vrot.slane %v1094, %v1123
        %v1125 = vlaneseq
        %v1126 = vshrl.u32 %v1125, 7
        %v1127 = vsub.s32 0, %v1126
        %v1128 = vrot.slane %v1096, %v1127
        %1129 = vset.pattern.permute.xlu0 0
        %1130 = vperm.xlu0 %1129, %v1100
        %v1131 = vpop.permute.xlu0 %1130
        %1133 = vset.pattern.permute.xlu0 0
        %1134 = vperm.xlu0 %1133, %v1104
        %v1135 = vpop.permute.xlu0 %1134
        %1137 = vset.pattern.permute.xlu0 0
        %1138 = vperm.xlu0 %1137, %v1108
        %v1139 = vpop.permute.xlu0 %1138
        %1141 = vset.pattern.permute.xlu0 0
        %1142 = vperm.xlu0 %1141, %v1112
        %v1143 = vpop.permute.xlu0 %1142
        %1145 = vset.pattern.permute.xlu0 0
        %1146 = vperm.xlu0 %1145, %v1116
        %v1147 = vpop.permute.xlu0 %1146
        %1149 = vset.pattern.permute.xlu0 0
        %1150 = vperm.xlu0 %1149, %v1120
        %v1151 = vpop.permute.xlu0 %1150
        %1153 = vset.pattern.permute.xlu0 0
        %1154 = vperm.xlu0 %1153, %v1124
        %v1155 = vpop.permute.xlu0 %1154
        %1157 = vset.pattern.permute.xlu0 0
        %1158 = vperm.xlu0 %1157, %v1128
        %v1159 = vpop.permute.xlu0 %1158
        %v1163 = vpack.i.b16 %v1011, %v1010
        %v1165 = vshrl.u32 %v1010, 16
        %v1166 = vshrl.u32 %v1011, 16
        %v1167 = vpack.i.b16 %v1166, %v1165
        %v1171 = vpack.i.b16 %v1013, %v1012
        %v1173 = vshrl.u32 %v1012, 16
        %v1174 = vshrl.u32 %v1013, 16
        %v1175 = vpack.i.b16 %v1174, %v1173
        %v1179 = vpack.i.b16 %v1015, %v1014
        %v1181 = vshrl.u32 %v1014, 16
        %v1182 = vshrl.u32 %v1015, 16
        %v1183 = vpack.i.b16 %v1182, %v1181
        %v1187 = vpack.i.b16 %v1017, %v1016
        %v1189 = vshrl.u32 %v1016, 16
        %v1190 = vshrl.u32 %v1017, 16
        %v1191 = vpack.i.b16 %v1190, %v1189
        %v1195 = vpack.i.b16 %v1019, %v1018
        %v1197 = vshrl.u32 %v1018, 16
        %v1198 = vshrl.u32 %v1019, 16
        %v1199 = vpack.i.b16 %v1198, %v1197
        %v1203 = vpack.i.b16 %v1021, %v1020
        %v1205 = vshrl.u32 %v1020, 16
        %v1206 = vshrl.u32 %v1021, 16
        %v1207 = vpack.i.b16 %v1206, %v1205
        %v1211 = vpack.i.b16 %v1023, %v1022
        %v1213 = vshrl.u32 %v1022, 16
        %v1214 = vshrl.u32 %v1023, 16
        %v1215 = vpack.i.b16 %v1214, %v1213
        %v1219 = vpack.i.b16 %v1025, %v1024
        %v1221 = vshrl.u32 %v1024, 16
        %v1222 = vshrl.u32 %v1025, 16
        %v1223 = vpack.i.b16 %v1222, %v1221
        %v1227 = vpack.i.b16 %v1027, %v1026
        %v1229 = vshrl.u32 %v1026, 16
        %v1230 = vshrl.u32 %v1027, 16
        %v1231 = vpack.i.b16 %v1230, %v1229
        %v1235 = vpack.i.b16 %v1029, %v1028
        %v1237 = vshrl.u32 %v1028, 16
        %v1238 = vshrl.u32 %v1029, 16
        %v1239 = vpack.i.b16 %v1238, %v1237
        %v1243 = vpack.i.b16 %v1031, %v1030
        %v1245 = vshrl.u32 %v1030, 16
        %v1246 = vshrl.u32 %v1031, 16
        %v1247 = vpack.i.b16 %v1246, %v1245
        %v1251 = vpack.i.b16 %v1033, %v1032
        %v1253 = vshrl.u32 %v1032, 16
        %v1254 = vshrl.u32 %v1033, 16
        %v1255 = vpack.i.b16 %v1254, %v1253
        %v1259 = vpack.i.b16 %v1035, %v1034
        %v1261 = vshrl.u32 %v1034, 16
        %v1262 = vshrl.u32 %v1035, 16
        %v1263 = vpack.i.b16 %v1262, %v1261
        %v1267 = vpack.i.b16 %v1037, %v1036
        %v1269 = vshrl.u32 %v1036, 16
        %v1270 = vshrl.u32 %v1037, 16
        %v1271 = vpack.i.b16 %v1270, %v1269
        %v1275 = vpack.i.b16 %v1039, %v1038
        %v1277 = vshrl.u32 %v1038, 16
        %v1278 = vshrl.u32 %v1039, 16
        %v1279 = vpack.i.b16 %v1278, %v1277
        %v1283 = vpack.i.b16 %v1041, %v1040
        %v1285 = vshrl.u32 %v1040, 16
        %v1286 = vshrl.u32 %v1041, 16
        %v1287 = vpack.i.b16 %v1286, %v1285
        %v1291 = vpack.i.b16 %v1043, %v1042
        %v1293 = vshrl.u32 %v1042, 16
        %v1294 = vshrl.u32 %v1043, 16
        %v1295 = vpack.i.b16 %v1294, %v1293
        %v1299 = vpack.i.b16 %v1045, %v1044
        %v1301 = vshrl.u32 %v1044, 16
        %v1302 = vshrl.u32 %v1045, 16
        %v1303 = vpack.i.b16 %v1302, %v1301
        %v1306 = vpack.i.b16 0, 0
        %v1308 = vshrl.u32 0, 16
        %v1309 = vpack.i.b16 %v1308, %v1308
        %v1311 = vcombine.low %v1163, %v1179
        %v1312 = vcombine.high %v1163, %v1179
        %v1314 = vunpack.c.l.s4 1983009808
        %v1315 = vunpack.c.0.s8 %v1314
        %v1316 = vlaneseq
        %v1317 = vshrl.u32 %v1316, 7
        %v1318 = vsub.s32 %v1315, %v1317
        %v1319 = vrot.slane %v1311, %v1318
        %v1321 = vunpack.c.l.s4 1983009808
        %v1322 = vunpack.c.0.s8 %v1321
        %v1323 = vlaneseq
        %v1324 = vshrl.u32 %v1323, 7
        %v1325 = vsub.s32 %v1322, %v1324
        %v1326 = vrot.slane %v1312, %v1325
        %v1327 = vcombine.low %v1171, %v1187
        %v1328 = vcombine.high %v1171, %v1187
        %v1330 = vunpack.c.l.s4 1983009808
        %v1331 = vunpack.c.0.s8 %v1330
        %v1332 = vlaneseq
        %v1333 = vshrl.u32 %v1332, 7
        %v1334 = vsub.s32 %v1331, %v1333
        %v1335 = vrot.slane %v1327, %v1334
        %v1337 = vunpack.c.l.s4 1983009808
        %v1338 = vunpack.c.0.s8 %v1337
        %v1339 = vlaneseq
        %v1340 = vshrl.u32 %v1339, 7
        %v1341 = vsub.s32 %v1338, %v1340
        %v1342 = vrot.slane %v1328, %v1341
        %v1343 = vcombine.low %v1195, %v1211
        %v1344 = vcombine.high %v1195, %v1211
        %v1346 = vunpack.c.l.s4 1983009808
        %v1347 = vunpack.c.0.s8 %v1346
        %v1348 = vlaneseq
        %v1349 = vshrl.u32 %v1348, 7
        %v1350 = vsub.s32 %v1347, %v1349
        %v1351 = vrot.slane %v1343, %v1350
        %v1353 = vunpack.c.l.s4 1983009808
        %v1354 = vunpack.c.0.s8 %v1353
        %v1355 = vlaneseq
        %v1356 = vshrl.u32 %v1355, 7
        %v1357 = vsub.s32 %v1354, %v1356
        %v1358 = vrot.slane %v1344, %v1357
        %v1359 = vcombine.low %v1203, %v1219
        %v1360 = vcombine.high %v1203, %v1219
        %v1362 = vunpack.c.l.s4 1983009808
        %v1363 = vunpack.c.0.s8 %v1362
        %v1364 = vlaneseq
        %v1365 = vshrl.u32 %v1364, 7
        %v1366 = vsub.s32 %v1363, %v1365
        %v1367 = vrot.slane %v1359, %v1366
        %v1369 = vunpack.c.l.s4 1983009808
        %v1370 = vunpack.c.0.s8 %v1369
        %v1371 = vlaneseq
        %v1372 = vshrl.u32 %v1371, 7
        %v1373 = vsub.s32 %v1370, %v1372
        %v1374 = vrot.slane %v1360, %v1373
        %v1375 = vcombine.low %v1319, %v1335
        %v1376 = vcombine.high %v1319, %v1335
        %v1378 = vunpack.c.l.s4 1934713408
        %v1379 = vunpack.c.0.s8 %v1378
        %v1380 = vlaneseq
        %v1381 = vshrl.u32 %v1380, 7
        %v1382 = vsub.s32 %v1379, %v1381
        %v1383 = vrot.slane %v1375, %v1382
        %v1385 = vunpack.c.l.s4 1934713408
        %v1386 = vunpack.c.0.s8 %v1385
        %v1387 = vlaneseq
        %v1388 = vshrl.u32 %v1387, 7
        %v1389 = vsub.s32 %v1386, %v1388
        %v1390 = vrot.slane %v1376, %v1389
        %v1391 = vcombine.low %v1326, %v1342
        %v1392 = vcombine.high %v1326, %v1342
        %v1394 = vunpack.c.l.s4 1934713408
        %v1395 = vunpack.c.0.s8 %v1394
        %v1396 = vlaneseq
        %v1397 = vshrl.u32 %v1396, 7
        %v1398 = vsub.s32 %v1395, %v1397
        %v1399 = vrot.slane %v1391, %v1398
        %v1401 = vunpack.c.l.s4 1934713408
        %v1402 = vunpack.c.0.s8 %v1401
        %v1403 = vlaneseq
        %v1404 = vshrl.u32 %v1403, 7
        %v1405 = vsub.s32 %v1402, %v1404
        %v1406 = vrot.slane %v1392, %v1405
        %v1407 = vcombine.low %v1351, %v1367
        %v1408 = vcombine.high %v1351, %v1367
        %v1410 = vunpack.c.l.s4 1934713408
        %v1411 = vunpack.c.0.s8 %v1410
        %v1412 = vlaneseq
        %v1413 = vshrl.u32 %v1412, 7
        %v1414 = vsub.s32 %v1411, %v1413
        %v1415 = vrot.slane %v1407, %v1414
        %v1417 = vunpack.c.l.s4 1934713408
        %v1418 = vunpack.c.0.s8 %v1417
        %v1419 = vlaneseq
        %v1420 = vshrl.u32 %v1419, 7
        %v1421 = vsub.s32 %v1418, %v1420
        %v1422 = vrot.slane %v1408, %v1421
        %v1423 = vcombine.low %v1358, %v1374
        %v1424 = vcombine.high %v1358, %v1374
        %v1426 = vunpack.c.l.s4 1934713408
        %v1427 = vunpack.c.0.s8 %v1426
        %v1428 = vlaneseq
        %v1429 = vshrl.u32 %v1428, 7
        %v1430 = vsub.s32 %v1427, %v1429
        %v1431 = vrot.slane %v1423, %v1430
        %v1433 = vunpack.c.l.s4 1934713408
        %v1434 = vunpack.c.0.s8 %v1433
        %v1435 = vlaneseq
        %v1436 = vshrl.u32 %v1435, 7
        %v1437 = vsub.s32 %v1434, %v1436
        %v1438 = vrot.slane %v1424, %v1437
        %v1439 = vcombine.low %v1383, %v1415
        %v1440 = vcombine.high %v1383, %v1415
        %v1441 = vcombine.low %v1390, %v1422
        %v1442 = vcombine.high %v1390, %v1422
        %v1443 = vcombine.low %v1399, %v1431
        %v1444 = vcombine.high %v1399, %v1431
        %v1445 = vcombine.low %v1406, %v1438
        %v1446 = vcombine.high %v1406, %v1438
        %v1447 = vcombine.low %v1167, %v1183
        %v1448 = vcombine.high %v1167, %v1183
        %v1450 = vunpack.c.l.s4 1983009808
        %v1451 = vunpack.c.0.s8 %v1450
        %v1452 = vlaneseq
        %v1453 = vshrl.u32 %v1452, 7
        %v1454 = vsub.s32 %v1451, %v1453
        %v1455 = vrot.slane %v1447, %v1454
        %v1457 = vunpack.c.l.s4 1983009808
        %v1458 = vunpack.c.0.s8 %v1457
        %v1459 = vlaneseq
        %v1460 = vshrl.u32 %v1459, 7
        %v1461 = vsub.s32 %v1458, %v1460
        %v1462 = vrot.slane %v1448, %v1461
        %v1463 = vcombine.low %v1175, %v1191
        %v1464 = vcombine.high %v1175, %v1191
        %v1466 = vunpack.c.l.s4 1983009808
        %v1467 = vunpack.c.0.s8 %v1466
        %v1468 = vlaneseq
        %v1469 = vshrl.u32 %v1468, 7
        %v1470 = vsub.s32 %v1467, %v1469
        %v1471 = vrot.slane %v1463, %v1470
        %v1473 = vunpack.c.l.s4 1983009808
        %v1474 = vunpack.c.0.s8 %v1473
        %v1475 = vlaneseq
        %v1476 = vshrl.u32 %v1475, 7
        %v1477 = vsub.s32 %v1474, %v1476
        %v1478 = vrot.slane %v1464, %v1477
        %v1479 = vcombine.low %v1199, %v1215
        %v1480 = vcombine.high %v1199, %v1215
        %v1482 = vunpack.c.l.s4 1983009808
        %v1483 = vunpack.c.0.s8 %v1482
        %v1484 = vlaneseq
        %v1485 = vshrl.u32 %v1484, 7
        %v1486 = vsub.s32 %v1483, %v1485
        %v1487 = vrot.slane %v1479, %v1486
        %v1489 = vunpack.c.l.s4 1983009808
        %v1490 = vunpack.c.0.s8 %v1489
        %v1491 = vlaneseq
        %v1492 = vshrl.u32 %v1491, 7
        %v1493 = vsub.s32 %v1490, %v1492
        %v1494 = vrot.slane %v1480, %v1493
        %v1495 = vcombine.low %v1207, %v1223
        %v1496 = vcombine.high %v1207, %v1223
        %v1498 = vunpack.c.l.s4 1983009808
        %v1499 = vunpack.c.0.s8 %v1498
        %v1500 = vlaneseq
        %v1501 = vshrl.u32 %v1500, 7
        %v1502 = vsub.s32 %v1499, %v1501
        %v1503 = vrot.slane %v1495, %v1502
        %v1505 = vunpack.c.l.s4 1983009808
        %v1506 = vunpack.c.0.s8 %v1505
        %v1507 = vlaneseq
        %v1508 = vshrl.u32 %v1507, 7
        %v1509 = vsub.s32 %v1506, %v1508
        %v1510 = vrot.slane %v1496, %v1509
        %v1511 = vcombine.low %v1455, %v1471
        %v1512 = vcombine.high %v1455, %v1471
        %v1514 = vunpack.c.l.s4 1934713408
        %v1515 = vunpack.c.0.s8 %v1514
        %v1516 = vlaneseq
        %v1517 = vshrl.u32 %v1516, 7
        %v1518 = vsub.s32 %v1515, %v1517
        %v1519 = vrot.slane %v1511, %v1518
        %v1521 = vunpack.c.l.s4 1934713408
        %v1522 = vunpack.c.0.s8 %v1521
        %v1523 = vlaneseq
        %v1524 = vshrl.u32 %v1523, 7
        %v1525 = vsub.s32 %v1522, %v1524
        %v1526 = vrot.slane %v1512, %v1525
        %v1527 = vcombine.low %v1462, %v1478
        %v1528 = vcombine.high %v1462, %v1478
        %v1530 = vunpack.c.l.s4 1934713408
        %v1531 = vunpack.c.0.s8 %v1530
        %v1532 = vlaneseq
        %v1533 = vshrl.u32 %v1532, 7
        %v1534 = vsub.s32 %v1531, %v1533
        %v1535 = vrot.slane %v1527, %v1534
        %v1537 = vunpack.c.l.s4 1934713408
        %v1538 = vunpack.c.0.s8 %v1537
        %v1539 = vlaneseq
        %v1540 = vshrl.u32 %v1539, 7
        %v1541 = vsub.s32 %v1538, %v1540
        %v1542 = vrot.slane %v1528, %v1541
        %v1543 = vcombine.low %v1487, %v1503
        %v1544 = vcombine.high %v1487, %v1503
        %v1546 = vunpack.c.l.s4 1934713408
        %v1547 = vunpack.c.0.s8 %v1546
        %v1548 = vlaneseq
        %v1549 = vshrl.u32 %v1548, 7
        %v1550 = vsub.s32 %v1547, %v1549
        %v1551 = vrot.slane %v1543, %v1550
        %v1553 = vunpack.c.l.s4 1934713408
        %v1554 = vunpack.c.0.s8 %v1553
        %v1555 = vlaneseq
        %v1556 = vshrl.u32 %v1555, 7
        %v1557 = vsub.s32 %v1554, %v1556
        %v1558 = vrot.slane %v1544, %v1557
        %v1559 = vcombine.low %v1494, %v1510
        %v1560 = vcombine.high %v1494, %v1510
        %v1562 = vunpack.c.l.s4 1934713408
        %v1563 = vunpack.c.0.s8 %v1562
        %v1564 = vlaneseq
        %v1565 = vshrl.u32 %v1564, 7
        %v1566 = vsub.s32 %v1563, %v1565
        %v1567 = vrot.slane %v1559, %v1566
        %v1569 = vunpack.c.l.s4 1934713408
        %v1570 = vunpack.c.0.s8 %v1569
        %v1571 = vlaneseq
        %v1572 = vshrl.u32 %v1571, 7
        %v1573 = vsub.s32 %v1570, %v1572
        %v1574 = vrot.slane %v1560, %v1573
        %v1575 = vcombine.low %v1519, %v1551
        %v1576 = vcombine.high %v1519, %v1551
        %v1577 = vcombine.low %v1526, %v1558
        %v1578 = vcombine.high %v1526, %v1558
        %v1579 = vcombine.low %v1535, %v1567
        %v1580 = vcombine.high %v1535, %v1567
        %v1581 = vcombine.low %v1542, %v1574
        %v1582 = vcombine.high %v1542, %v1574
        %v1583 = vcombine.low %v1227, %v1243
        %v1584 = vcombine.high %v1227, %v1243
        %v1586 = vunpack.c.l.s4 1983009808
        %v1587 = vunpack.c.0.s8 %v1586
        %v1588 = vlaneseq
        %v1589 = vshrl.u32 %v1588, 7
        %v1590 = vsub.s32 %v1587, %v1589
        %v1591 = vrot.slane %v1583, %v1590
        %v1593 = vunpack.c.l.s4 1983009808
        %v1594 = vunpack.c.0.s8 %v1593
        %v1595 = vlaneseq
        %v1596 = vshrl.u32 %v1595, 7
        %v1597 = vsub.s32 %v1594, %v1596
        %v1598 = vrot.slane %v1584, %v1597
        %v1599 = vcombine.low %v1235, %v1251
        %v1600 = vcombine.high %v1235, %v1251
        %v1602 = vunpack.c.l.s4 1983009808
        %v1603 = vunpack.c.0.s8 %v1602
        %v1604 = vlaneseq
        %v1605 = vshrl.u32 %v1604, 7
        %v1606 = vsub.s32 %v1603, %v1605
        %v1607 = vrot.slane %v1599, %v1606
        %v1609 = vunpack.c.l.s4 1983009808
        %v1610 = vunpack.c.0.s8 %v1609
        %v1611 = vlaneseq
        %v1612 = vshrl.u32 %v1611, 7
        %v1613 = vsub.s32 %v1610, %v1612
        %v1614 = vrot.slane %v1600, %v1613
        %v1615 = vcombine.low %v1259, %v1275
        %v1616 = vcombine.high %v1259, %v1275
        %v1618 = vunpack.c.l.s4 1983009808
        %v1619 = vunpack.c.0.s8 %v1618
        %v1620 = vlaneseq
        %v1621 = vshrl.u32 %v1620, 7
        %v1622 = vsub.s32 %v1619, %v1621
        %v1623 = vrot.slane %v1615, %v1622
        %v1625 = vunpack.c.l.s4 1983009808
        %v1626 = vunpack.c.0.s8 %v1625
        %v1627 = vlaneseq
        %v1628 = vshrl.u32 %v1627, 7
        %v1629 = vsub.s32 %v1626, %v1628
        %v1630 = vrot.slane %v1616, %v1629
        %v1631 = vcombine.low %v1267, %v1283
        %v1632 = vcombine.high %v1267, %v1283
        %v1634 = vunpack.c.l.s4 1983009808
        %v1635 = vunpack.c.0.s8 %v1634
        %v1636 = vlaneseq
        %v1637 = vshrl.u32 %v1636, 7
        %v1638 = vsub.s32 %v1635, %v1637
        %v1639 = vrot.slane %v1631, %v1638
        %v1641 = vunpack.c.l.s4 1983009808
        %v1642 = vunpack.c.0.s8 %v1641
        %v1643 = vlaneseq
        %v1644 = vshrl.u32 %v1643, 7
        %v1645 = vsub.s32 %v1642, %v1644
        %v1646 = vrot.slane %v1632, %v1645
        %v1647 = vcombine.low %v1591, %v1607
        %v1648 = vcombine.high %v1591, %v1607
        %v1650 = vunpack.c.l.s4 1934713408
        %v1651 = vunpack.c.0.s8 %v1650
        %v1652 = vlaneseq
        %v1653 = vshrl.u32 %v1652, 7
        %v1654 = vsub.s32 %v1651, %v1653
        %v1655 = vrot.slane %v1647, %v1654
        %v1657 = vunpack.c.l.s4 1934713408
        %v1658 = vunpack.c.0.s8 %v1657
        %v1659 = vlaneseq
        %v1660 = vshrl.u32 %v1659, 7
        %v1661 = vsub.s32 %v1658, %v1660
        %v1662 = vrot.slane %v1648, %v1661
        %v1663 = vcombine.low %v1598, %v1614
        %v1664 = vcombine.high %v1598, %v1614
        %v1666 = vunpack.c.l.s4 1934713408
        %v1667 = vunpack.c.0.s8 %v1666
        %v1668 = vlaneseq
        %v1669 = vshrl.u32 %v1668, 7
        %v1670 = vsub.s32 %v1667, %v1669
        %v1671 = vrot.slane %v1663, %v1670
        %v1673 = vunpack.c.l.s4 1934713408
        %v1674 = vunpack.c.0.s8 %v1673
        %v1675 = vlaneseq
        %v1676 = vshrl.u32 %v1675, 7
        %v1677 = vsub.s32 %v1674, %v1676
        %v1678 = vrot.slane %v1664, %v1677
        %v1679 = vcombine.low %v1623, %v1639
        %v1680 = vcombine.high %v1623, %v1639
        %v1682 = vunpack.c.l.s4 1934713408
        %v1683 = vunpack.c.0.s8 %v1682
        %v1684 = vlaneseq
        %v1685 = vshrl.u32 %v1684, 7
        %v1686 = vsub.s32 %v1683, %v1685
        %v1687 = vrot.slane %v1679, %v1686
        %v1689 = vunpack.c.l.s4 1934713408
        %v1690 = vunpack.c.0.s8 %v1689
        %v1691 = vlaneseq
        %v1692 = vshrl.u32 %v1691, 7
        %v1693 = vsub.s32 %v1690, %v1692
        %v1694 = vrot.slane %v1680, %v1693
        %v1695 = vcombine.low %v1630, %v1646
        %v1696 = vcombine.high %v1630, %v1646
        %v1698 = vunpack.c.l.s4 1934713408
        %v1699 = vunpack.c.0.s8 %v1698
        %v1700 = vlaneseq
        %v1701 = vshrl.u32 %v1700, 7
        %v1702 = vsub.s32 %v1699, %v1701
        %v1703 = vrot.slane %v1695, %v1702
        %v1705 = vunpack.c.l.s4 1934713408
        %v1706 = vunpack.c.0.s8 %v1705
        %v1707 = vlaneseq
        %v1708 = vshrl.u32 %v1707, 7
        %v1709 = vsub.s32 %v1706, %v1708
        %v1710 = vrot.slane %v1696, %v1709
        %v1711 = vcombine.low %v1655, %v1687
        %v1712 = vcombine.high %v1655, %v1687
        %v1713 = vcombine.low %v1662, %v1694
        %v1714 = vcombine.high %v1662, %v1694
        %v1715 = vcombine.low %v1671, %v1703
        %v1716 = vcombine.high %v1671, %v1703
        %v1717 = vcombine.low %v1678, %v1710
        %v1718 = vcombine.high %v1678, %v1710
        %v1719 = vcombine.low %v1231, %v1247
        %v1720 = vcombine.high %v1231, %v1247
        %v1722 = vunpack.c.l.s4 1983009808
        %v1723 = vunpack.c.0.s8 %v1722
        %v1724 = vlaneseq
        %v1725 = vshrl.u32 %v1724, 7
        %v1726 = vsub.s32 %v1723, %v1725
        %v1727 = vrot.slane %v1719, %v1726
        %v1729 = vunpack.c.l.s4 1983009808
        %v1730 = vunpack.c.0.s8 %v1729
        %v1731 = vlaneseq
        %v1732 = vshrl.u32 %v1731, 7
        %v1733 = vsub.s32 %v1730, %v1732
        %v1734 = vrot.slane %v1720, %v1733
        %v1735 = vcombine.low %v1239, %v1255
        %v1736 = vcombine.high %v1239, %v1255
        %v1738 = vunpack.c.l.s4 1983009808
        %v1739 = vunpack.c.0.s8 %v1738
        %v1740 = vlaneseq
        %v1741 = vshrl.u32 %v1740, 7
        %v1742 = vsub.s32 %v1739, %v1741
        %v1743 = vrot.slane %v1735, %v1742
        %v1745 = vunpack.c.l.s4 1983009808
        %v1746 = vunpack.c.0.s8 %v1745
        %v1747 = vlaneseq
        %v1748 = vshrl.u32 %v1747, 7
        %v1749 = vsub.s32 %v1746, %v1748
        %v1750 = vrot.slane %v1736, %v1749
        %v1751 = vcombine.low %v1263, %v1279
        %v1752 = vcombine.high %v1263, %v1279
        %v1754 = vunpack.c.l.s4 1983009808
        %v1755 = vunpack.c.0.s8 %v1754
        %v1756 = vlaneseq
        %v1757 = vshrl.u32 %v1756, 7
        %v1758 = vsub.s32 %v1755, %v1757
        %v1759 = vrot.slane %v1751, %v1758
        %v1761 = vunpack.c.l.s4 1983009808
        %v1762 = vunpack.c.0.s8 %v1761
        %v1763 = vlaneseq
        %v1764 = vshrl.u32 %v1763, 7
        %v1765 = vsub.s32 %v1762, %v1764
        %v1766 = vrot.slane %v1752, %v1765
        %v1767 = vcombine.low %v1271, %v1287
        %v1768 = vcombine.high %v1271, %v1287
        %v1770 = vunpack.c.l.s4 1983009808
        %v1771 = vunpack.c.0.s8 %v1770
        %v1772 = vlaneseq
        %v1773 = vshrl.u32 %v1772, 7
        %v1774 = vsub.s32 %v1771, %v1773
        %v1775 = vrot.slane %v1767, %v1774
        %v1777 = vunpack.c.l.s4 1983009808
        %v1778 = vunpack.c.0.s8 %v1777
        %v1779 = vlaneseq
        %v1780 = vshrl.u32 %v1779, 7
        %v1781 = vsub.s32 %v1778, %v1780
        %v1782 = vrot.slane %v1768, %v1781
        %v1783 = vcombine.low %v1727, %v1743
        %v1784 = vcombine.high %v1727, %v1743
        %v1786 = vunpack.c.l.s4 1934713408
        %v1787 = vunpack.c.0.s8 %v1786
        %v1788 = vlaneseq
        %v1789 = vshrl.u32 %v1788, 7
        %v1790 = vsub.s32 %v1787, %v1789
        %v1791 = vrot.slane %v1783, %v1790
        %v1793 = vunpack.c.l.s4 1934713408
        %v1794 = vunpack.c.0.s8 %v1793
        %v1795 = vlaneseq
        %v1796 = vshrl.u32 %v1795, 7
        %v1797 = vsub.s32 %v1794, %v1796
        %v1798 = vrot.slane %v1784, %v1797
        %v1799 = vcombine.low %v1734, %v1750
        %v1800 = vcombine.high %v1734, %v1750
        %v1802 = vunpack.c.l.s4 1934713408
        %v1803 = vunpack.c.0.s8 %v1802
        %v1804 = vlaneseq
        %v1805 = vshrl.u32 %v1804, 7
        %v1806 = vsub.s32 %v1803, %v1805
        %v1807 = vrot.slane %v1799, %v1806
        %v1809 = vunpack.c.l.s4 1934713408
        %v1810 = vunpack.c.0.s8 %v1809
        %v1811 = vlaneseq
        %v1812 = vshrl.u32 %v1811, 7
        %v1813 = vsub.s32 %v1810, %v1812
        %v1814 = vrot.slane %v1800, %v1813
        %v1815 = vcombine.low %v1759, %v1775
        %v1816 = vcombine.high %v1759, %v1775
        %v1818 = vunpack.c.l.s4 1934713408
        %v1819 = vunpack.c.0.s8 %v1818
        %v1820 = vlaneseq
        %v1821 = vshrl.u32 %v1820, 7
        %v1822 = vsub.s32 %v1819, %v1821
        %v1823 = vrot.slane %v1815, %v1822
        %v1825 = vunpack.c.l.s4 1934713408
        %v1826 = vunpack.c.0.s8 %v1825
        %v1827 = vlaneseq
        %v1828 = vshrl.u32 %v1827, 7
        %v1829 = vsub.s32 %v1826, %v1828
        %v1830 = vrot.slane %v1816, %v1829
        %v1831 = vcombine.low %v1766, %v1782
        %v1832 = vcombine.high %v1766, %v1782
        %v1834 = vunpack.c.l.s4 1934713408
        %v1835 = vunpack.c.0.s8 %v1834
        %v1836 = vlaneseq
        %v1837 = vshrl.u32 %v1836, 7
        %v1838 = vsub.s32 %v1835, %v1837
        %v1839 = vrot.slane %v1831, %v1838
        %v1841 = vunpack.c.l.s4 1934713408
        %v1842 = vunpack.c.0.s8 %v1841
        %v1843 = vlaneseq
        %v1844 = vshrl.u32 %v1843, 7
        %v1845 = vsub.s32 %v1842, %v1844
        %v1846 = vrot.slane %v1832, %v1845
        %v1847 = vcombine.low %v1791, %v1823
        %v1848 = vcombine.high %v1791, %v1823
        %v1849 = vcombine.low %v1798, %v1830
        %v1850 = vcombine.high %v1798, %v1830
        %v1851 = vcombine.low %v1807, %v1839
        %v1852 = vcombine.high %v1807, %v1839
        %v1853 = vcombine.low %v1814, %v1846
        %v1854 = vcombine.high %v1814, %v1846
        %v1855 = vcombine.high %v1291, %v1306
        %v1857 = vunpack.c.l.s4 1983009808
        %v1858 = vunpack.c.0.s8 %v1857
        %v1859 = vlaneseq
        %v1860 = vshrl.u32 %v1859, 7
        %v1861 = vsub.s32 %v1858, %v1860
        %v1862 = vrot.slane %v1291, %v1861
        %v1864 = vunpack.c.l.s4 1983009808
        %v1865 = vunpack.c.0.s8 %v1864
        %v1866 = vlaneseq
        %v1867 = vshrl.u32 %v1866, 7
        %v1868 = vsub.s32 %v1865, %v1867
        %v1869 = vrot.slane %v1855, %v1868
        %v1870 = vcombine.high %v1299, %v1306
        %v1872 = vunpack.c.l.s4 1983009808
        %v1873 = vunpack.c.0.s8 %v1872
        %v1874 = vlaneseq
        %v1875 = vshrl.u32 %v1874, 7
        %v1876 = vsub.s32 %v1873, %v1875
        %v1877 = vrot.slane %v1299, %v1876
        %v1879 = vunpack.c.l.s4 1983009808
        %v1880 = vunpack.c.0.s8 %v1879
        %v1881 = vlaneseq
        %v1882 = vshrl.u32 %v1881, 7
        %v1883 = vsub.s32 %v1880, %v1882
        %v1884 = vrot.slane %v1870, %v1883
        %v1885 = vcombine.low %v1862, %v1877
        %v1886 = vcombine.high %v1862, %v1877
        %v1888 = vunpack.c.l.s4 1934713408
        %v1889 = vunpack.c.0.s8 %v1888
        %v1890 = vlaneseq
        %v1891 = vshrl.u32 %v1890, 7
        %v1892 = vsub.s32 %v1889, %v1891
        %v1893 = vrot.slane %v1885, %v1892
        %v1895 = vunpack.c.l.s4 1934713408
        %v1896 = vunpack.c.0.s8 %v1895
        %v1897 = vlaneseq
        %v1898 = vshrl.u32 %v1897, 7
        %v1899 = vsub.s32 %v1896, %v1898
        %v1900 = vrot.slane %v1886, %v1899
        %v1901 = vcombine.low %v1869, %v1884
        %v1902 = vcombine.high %v1869, %v1884
        %v1904 = vunpack.c.l.s4 1934713408
        %v1905 = vunpack.c.0.s8 %v1904
        %v1906 = vlaneseq
        %v1907 = vshrl.u32 %v1906, 7
        %v1908 = vsub.s32 %v1905, %v1907
        %v1909 = vrot.slane %v1901, %v1908
        %v1911 = vunpack.c.l.s4 1934713408
        %v1912 = vunpack.c.0.s8 %v1911
        %v1913 = vlaneseq
        %v1914 = vshrl.u32 %v1913, 7
        %v1915 = vsub.s32 %v1912, %v1914
        %v1916 = vrot.slane %v1902, %v1915
        %v1917 = vcombine.high %v1893, 0
        %v1918 = vcombine.high %v1900, 0
        %v1919 = vcombine.high %v1909, 0
        %v1920 = vcombine.high %v1916, 0
        %v1921 = vcombine.high %v1295, %v1309
        %v1923 = vunpack.c.l.s4 1983009808
        %v1924 = vunpack.c.0.s8 %v1923
        %v1925 = vlaneseq
        %v1926 = vshrl.u32 %v1925, 7
        %v1927 = vsub.s32 %v1924, %v1926
        %v1928 = vrot.slane %v1295, %v1927
        %v1930 = vunpack.c.l.s4 1983009808
        %v1931 = vunpack.c.0.s8 %v1930
        %v1932 = vlaneseq
        %v1933 = vshrl.u32 %v1932, 7
        %v1934 = vsub.s32 %v1931, %v1933
        %v1935 = vrot.slane %v1921, %v1934
        %v1936 = vcombine.high %v1303, %v1309
        %v1938 = vunpack.c.l.s4 1983009808
        %v1939 = vunpack.c.0.s8 %v1938
        %v1940 = vlaneseq
        %v1941 = vshrl.u32 %v1940, 7
        %v1942 = vsub.s32 %v1939, %v1941
        %v1943 = vrot.slane %v1303, %v1942
        %v1945 = vunpack.c.l.s4 1983009808
        %v1946 = vunpack.c.0.s8 %v1945
        %v1947 = vlaneseq
        %v1948 = vshrl.u32 %v1947, 7
        %v1949 = vsub.s32 %v1946, %v1948
        %v1950 = vrot.slane %v1936, %v1949
        %v1951 = vcombine.low %v1928, %v1943
        %v1952 = vcombine.high %v1928, %v1943
        %v1954 = vunpack.c.l.s4 1934713408
        %v1955 = vunpack.c.0.s8 %v1954
        %v1956 = vlaneseq
        %v1957 = vshrl.u32 %v1956, 7
        %v1958 = vsub.s32 %v1955, %v1957
        %v1959 = vrot.slane %v1951, %v1958
        %v1961 = vunpack.c.l.s4 1934713408
        %v1962 = vunpack.c.0.s8 %v1961
        %v1963 = vlaneseq
        %v1964 = vshrl.u32 %v1963, 7
        %v1965 = vsub.s32 %v1962, %v1964
        %v1966 = vrot.slane %v1952, %v1965
        %v1967 = vcombine.low %v1935, %v1950
        %v1968 = vcombine.high %v1935, %v1950
        %v1970 = vunpack.c.l.s4 1934713408
        %v1971 = vunpack.c.0.s8 %v1970
        %v1972 = vlaneseq
        %v1973 = vshrl.u32 %v1972, 7
        %v1974 = vsub.s32 %v1971, %v1973
        %v1975 = vrot.slane %v1967, %v1974
        %v1977 = vunpack.c.l.s4 1934713408
        %v1978 = vunpack.c.0.s8 %v1977
        %v1979 = vlaneseq
        %v1980 = vshrl.u32 %v1979, 7
        %v1981 = vsub.s32 %v1978, %v1980
        %v1982 = vrot.slane %v1968, %v1981
        %v1983 = vcombine.high %v1959, 0
        %v1984 = vcombine.high %v1966, 0
        %v1985 = vcombine.high %v1975, 0
        %v1986 = vcombine.high %v1982, 0
        %1990 = vrot.lane.b32.xlu0 %v1575, 16
        %v1991 = vpop.permute.xlu0 %1990
        %1992 = vrot.lane.b32.xlu0 %v1847, 16
        %v1993 = vpop.permute.xlu0 %1992
        %1994 = vrot.lane.b32.xlu0 %v1959, 16
        %v1995 = vpop.permute.xlu0 %1994
        %1999 = vrot.lane.b32.xlu0 %v1440, 32
        %v2000 = vpop.permute.xlu0 %1999
        %2001 = vrot.lane.b32.xlu0 %v1712, 32
        %v2002 = vpop.permute.xlu0 %2001
        %2003 = vrot.lane.b32.xlu0 %v1917, 32
        %v2004 = vpop.permute.xlu0 %2003
        %2008 = vrot.lane.b32.xlu0 %v1576, 48
        %v2009 = vpop.permute.xlu0 %2008
        %2010 = vrot.lane.b32.xlu0 %v1848, 48
        %v2011 = vpop.permute.xlu0 %2010
        %2012 = vrot.lane.b32.xlu0 %v1983, 48
        %v2013 = vpop.permute.xlu0 %2012
        %2017 = vrot.lane.b32.xlu0 %v1441, 64
        %v2018 = vpop.permute.xlu0 %2017
        %2019 = vrot.lane.b32.xlu0 %v1713, 64
        %v2020 = vpop.permute.xlu0 %2019
        %2021 = vrot.lane.b32.xlu0 %v1900, 64
        %v2022 = vpop.permute.xlu0 %2021
        %2026 = vrot.lane.b32.xlu0 %v1577, 80
        %v2027 = vpop.permute.xlu0 %2026
        %2028 = vrot.lane.b32.xlu0 %v1849, 80
        %v2029 = vpop.permute.xlu0 %2028
        %2030 = vrot.lane.b32.xlu0 %v1966, 80
        %v2031 = vpop.permute.xlu0 %2030
        %2035 = vrot.lane.b32.xlu0 %v1442, 96
        %v2036 = vpop.permute.xlu0 %2035
        %2037 = vrot.lane.b32.xlu0 %v1714, 96
        %v2038 = vpop.permute.xlu0 %2037
        %2039 = vrot.lane.b32.xlu0 %v1918, 96
        %v2040 = vpop.permute.xlu0 %2039
        %2044 = vrot.lane.b32.xlu0 %v1578, 112
        %v2045 = vpop.permute.xlu0 %2044
        %2046 = vrot.lane.b32.xlu0 %v1850, 112
        %v2047 = vpop.permute.xlu0 %2046
        %2048 = vrot.lane.b32.xlu0 %v1984, 112
        %v2049 = vpop.permute.xlu0 %2048
        %2053 = vrot.lane.b32.xlu0 %v1579, 16
        %v2054 = vpop.permute.xlu0 %2053
        %2055 = vrot.lane.b32.xlu0 %v1851, 16
        %v2056 = vpop.permute.xlu0 %2055
        %2057 = vrot.lane.b32.xlu0 %v1975, 16
        %v2058 = vpop.permute.xlu0 %2057
        %2062 = vrot.lane.b32.xlu0 %v1444, 32
        %v2063 = vpop.permute.xlu0 %2062
        %2064 = vrot.lane.b32.xlu0 %v1716, 32
        %v2065 = vpop.permute.xlu0 %2064
        %2066 = vrot.lane.b32.xlu0 %v1919, 32
        %v2067 = vpop.permute.xlu0 %2066
        %2071 = vrot.lane.b32.xlu0 %v1580, 48
        %v2072 = vpop.permute.xlu0 %2071
        %2073 = vrot.lane.b32.xlu0 %v1852, 48
        %v2074 = vpop.permute.xlu0 %2073
        %2075 = vrot.lane.b32.xlu0 %v1985, 48
        %v2076 = vpop.permute.xlu0 %2075
        %2080 = vrot.lane.b32.xlu0 %v1445, 64
        %v2081 = vpop.permute.xlu0 %2080
        %2082 = vrot.lane.b32.xlu0 %v1717, 64
        %v2083 = vpop.permute.xlu0 %2082
        %2084 = vrot.lane.b32.xlu0 %v1916, 64
        %v2085 = vpop.permute.xlu0 %2084
        %2089 = vrot.lane.b32.xlu0 %v1581, 80
        %v2090 = vpop.permute.xlu0 %2089
        %2091 = vrot.lane.b32.xlu0 %v1853, 80
        %v2092 = vpop.permute.xlu0 %2091
        %2093 = vrot.lane.b32.xlu0 %v1982, 80
        %v2094 = vpop.permute.xlu0 %2093
        %2098 = vrot.lane.b32.xlu0 %v1446, 96
        %v2099 = vpop.permute.xlu0 %2098
        %2100 = vrot.lane.b32.xlu0 %v1718, 96
        %v2101 = vpop.permute.xlu0 %2100
        %2102 = vrot.lane.b32.xlu0 %v1920, 96
        %v2103 = vpop.permute.xlu0 %2102
        %2107 = vrot.lane.b32.xlu0 %v1582, 112
        %v2108 = vpop.permute.xlu0 %2107
        %2109 = vrot.lane.b32.xlu0 %v1854, 112
        %v2110 = vpop.permute.xlu0 %2109
        %2111 = vrot.lane.b32.xlu0 %v1986, 112
        %v2112 = vpop.permute.xlu0 %2111
        %v2115 = vsel %vm720, %v1439, %v1991
        %v2118 = vsel %vm720, %v1711, %v1993
        %v2121 = vsel %vm720, %v1893, %v1995
        %vm2122 = vcmask 261120
        %v2124 = vsel %vm2122, %v2115, %v2000
        %v2126 = vsel %vm2122, %v2118, %v2002
        %v2128 = vsel %vm2122, %v2121, %v2004
        %vm2129 = vcmask 392192
        %v2131 = vsel %vm2129, %v2124, %v2009
        %v2133 = vsel %vm2129, %v2126, %v2011
        %v2135 = vsel %vm2129, %v2128, %v2013
        %vm2136 = vcmask 523264
        %v2138 = vsel %vm2136, %v2131, %v2018
        %v2140 = vsel %vm2136, %v2133, %v2020
        %v2142 = vsel %vm2136, %v2135, %v2022
        %vm2143 = vcmask 654336
        %v2145 = vsel %vm2143, %v2138, %v2027
        %v2147 = vsel %vm2143, %v2140, %v2029
        %v2149 = vsel %vm2143, %v2142, %v2031
        %vm2150 = vcmask 785408
        %v2152 = vsel %vm2150, %v2145, %v2036
        %v2154 = vsel %vm2150, %v2147, %v2038
        %v2156 = vsel %vm2150, %v2149, %v2040
        %vm2157 = vcmask 916480
        %v2159 = vsel %vm2157, %v2152, %v2045
        %v2162 = vsel %vm2157, %v2154, %v2047
        %v2165 = vsel %vm2157, %v2156, %v2049
        %v2168 = vsel %vm720, %v1443, %v2054
        %v2171 = vsel %vm720, %v1715, %v2056
        %v2174 = vsel %vm720, %v1909, %v2058
        %v2176 = vsel %vm2122, %v2168, %v2063
        %v2178 = vsel %vm2122, %v2171, %v2065
        %v2180 = vsel %vm2122, %v2174, %v2067
        %v2182 = vsel %vm2129, %v2176, %v2072
        %v2184 = vsel %vm2129, %v2178, %v2074
        %v2186 = vsel %vm2129, %v2180, %v2076
        %v2188 = vsel %vm2136, %v2182, %v2081
        %v2190 = vsel %vm2136, %v2184, %v2083
        %v2192 = vsel %vm2136, %v2186, %v2085
        %v2194 = vsel %vm2143, %v2188, %v2090
        %v2196 = vsel %vm2143, %v2190, %v2092
        %v2198 = vsel %vm2143, %v2192, %v2094
        %v2200 = vsel %vm2150, %v2194, %v2099
        %v2202 = vsel %vm2150, %v2196, %v2101
        %v2204 = vsel %vm2150, %v2198, %v2103
        %v2206 = vsel %vm2157, %v2200, %v2108
        %v2209 = vsel %vm2157, %v2202, %v2110
        %v2212 = vsel %vm2157, %v2204, %v2112
        %v2213 = vcombine.low %v1131, %v1139
        %v2214 = vcombine.high %v1131, %v1139
        %v2216 = vunpack.c.l.s4 1983009808
        %v2217 = vunpack.c.0.s8 %v2216
        %v2218 = vlaneseq
        %v2219 = vshrl.u32 %v2218, 7
        %v2220 = vsub.s32 %v2217, %v2219
        %v2221 = vrot.slane %v2213, %v2220
        %v2223 = vunpack.c.l.s4 1983009808
        %v2224 = vunpack.c.0.s8 %v2223
        %v2225 = vlaneseq
        %v2226 = vshrl.u32 %v2225, 7
        %v2227 = vsub.s32 %v2224, %v2226
        %v2228 = vrot.slane %v2214, %v2227
        %v2229 = vcombine.low %v1135, %v1143
        %v2230 = vcombine.high %v1135, %v1143
        %v2232 = vunpack.c.l.s4 1983009808
        %v2233 = vunpack.c.0.s8 %v2232
        %v2234 = vlaneseq
        %v2235 = vshrl.u32 %v2234, 7
        %v2236 = vsub.s32 %v2233, %v2235
        %v2237 = vrot.slane %v2229, %v2236
        %v2239 = vunpack.c.l.s4 1983009808
        %v2240 = vunpack.c.0.s8 %v2239
        %v2241 = vlaneseq
        %v2242 = vshrl.u32 %v2241, 7
        %v2243 = vsub.s32 %v2240, %v2242
        %v2244 = vrot.slane %v2230, %v2243
        %v2245 = vcombine.low %v1147, %v1155
        %v2246 = vcombine.high %v1147, %v1155
        %v2248 = vunpack.c.l.s4 1983009808
        %v2249 = vunpack.c.0.s8 %v2248
        %v2250 = vlaneseq
        %v2251 = vshrl.u32 %v2250, 7
        %v2252 = vsub.s32 %v2249, %v2251
        %v2253 = vrot.slane %v2245, %v2252
        %v2255 = vunpack.c.l.s4 1983009808
        %v2256 = vunpack.c.0.s8 %v2255
        %v2257 = vlaneseq
        %v2258 = vshrl.u32 %v2257, 7
        %v2259 = vsub.s32 %v2256, %v2258
        %v2260 = vrot.slane %v2246, %v2259
        %v2261 = vcombine.low %v1151, %v1159
        %v2262 = vcombine.high %v1151, %v1159
        %v2264 = vunpack.c.l.s4 1983009808
        %v2265 = vunpack.c.0.s8 %v2264
        %v2266 = vlaneseq
        %v2267 = vshrl.u32 %v2266, 7
        %v2268 = vsub.s32 %v2265, %v2267
        %v2269 = vrot.slane %v2261, %v2268
        %v2271 = vunpack.c.l.s4 1983009808
        %v2272 = vunpack.c.0.s8 %v2271
        %v2273 = vlaneseq
        %v2274 = vshrl.u32 %v2273, 7
        %v2275 = vsub.s32 %v2272, %v2274
        %v2276 = vrot.slane %v2262, %v2275
        %v2277 = vcombine.low %v2221, %v2237
        %v2278 = vcombine.high %v2221, %v2237
        %v2280 = vunpack.c.l.s4 1934713408
        %v2281 = vunpack.c.0.s8 %v2280
        %v2282 = vlaneseq
        %v2283 = vshrl.u32 %v2282, 7
        %v2284 = vsub.s32 %v2281, %v2283
        %v2285 = vrot.slane %v2277, %v2284
        %v2287 = vunpack.c.l.s4 1934713408
        %v2288 = vunpack.c.0.s8 %v2287
        %v2289 = vlaneseq
        %v2290 = vshrl.u32 %v2289, 7
        %v2291 = vsub.s32 %v2288, %v2290
        %v2292 = vrot.slane %v2278, %v2291
        %v2293 = vcombine.low %v2228, %v2244
        %v2294 = vcombine.high %v2228, %v2244
        %v2296 = vunpack.c.l.s4 1934713408
        %v2297 = vunpack.c.0.s8 %v2296
        %v2298 = vlaneseq
        %v2299 = vshrl.u32 %v2298, 7
        %v2300 = vsub.s32 %v2297, %v2299
        %v2301 = vrot.slane %v2293, %v2300
        %v2303 = vunpack.c.l.s4 1934713408
        %v2304 = vunpack.c.0.s8 %v2303
        %v2305 = vlaneseq
        %v2306 = vshrl.u32 %v2305, 7
        %v2307 = vsub.s32 %v2304, %v2306
        %v2308 = vrot.slane %v2294, %v2307
        %v2309 = vcombine.low %v2253, %v2269
        %v2310 = vcombine.high %v2253, %v2269
        %v2312 = vunpack.c.l.s4 1934713408
        %v2313 = vunpack.c.0.s8 %v2312
        %v2314 = vlaneseq
        %v2315 = vshrl.u32 %v2314, 7
        %v2316 = vsub.s32 %v2313, %v2315
        %v2317 = vrot.slane %v2309, %v2316
        %v2319 = vunpack.c.l.s4 1934713408
        %v2320 = vunpack.c.0.s8 %v2319
        %v2321 = vlaneseq
        %v2322 = vshrl.u32 %v2321, 7
        %v2323 = vsub.s32 %v2320, %v2322
        %v2324 = vrot.slane %v2310, %v2323
        %v2325 = vcombine.low %v2260, %v2276
        %v2326 = vcombine.high %v2260, %v2276
        %v2328 = vunpack.c.l.s4 1934713408
        %v2329 = vunpack.c.0.s8 %v2328
        %v2330 = vlaneseq
        %v2331 = vshrl.u32 %v2330, 7
        %v2332 = vsub.s32 %v2329, %v2331
        %v2333 = vrot.slane %v2325, %v2332
        %v2335 = vunpack.c.l.s4 1934713408
        %v2336 = vunpack.c.0.s8 %v2335
        %v2337 = vlaneseq
        %v2338 = vshrl.u32 %v2337, 7
        %v2339 = vsub.s32 %v2336, %v2338
        %v2340 = vrot.slane %v2326, %v2339
        %v2341 = vcombine.low %v2285, %v2317
        %v2342 = vcombine.high %v2285, %v2317
        %v2343 = vcombine.low %v2292, %v2324
        %v2344 = vcombine.high %v2292, %v2324
        %v2345 = vcombine.low %v2301, %v2333
        %v2346 = vcombine.high %v2301, %v2333
        %v2347 = vcombine.low %v2308, %v2340
        %v2348 = vcombine.high %v2308, %v2340
        %2350 = vrot.lane.b32.xlu0 %v2342, 16
        %v2351 = vpop.permute.xlu0 %2350
        %2354 = vrot.lane.b32.xlu0 %v2343, 32
        %v2355 = vpop.permute.xlu0 %2354
        %2358 = vrot.lane.b32.xlu0 %v2344, 48
        %v2359 = vpop.permute.xlu0 %2358
        %2362 = vrot.lane.b32.xlu0 %v2345, 64
        %v2363 = vpop.permute.xlu0 %2362
        %2366 = vrot.lane.b32.xlu0 %v2346, 80
        %v2367 = vpop.permute.xlu0 %2366
        %2370 = vrot.lane.b32.xlu0 %v2347, 96
        %v2371 = vpop.permute.xlu0 %2370
        %2374 = vrot.lane.b32.xlu0 %v2348, 112
        %v2375 = vpop.permute.xlu0 %2374
        %v2377 = vsel %vm720, %v2341, %v2351
        %v2378 = vsel %vm2122, %v2377, %v2355
        %v2379 = vsel %vm2129, %v2378, %v2359
        %v2380 = vsel %vm2136, %v2379, %v2363
        %v2381 = vsel %vm2143, %v2380, %v2367
        %v2382 = vsel %vm2150, %v2381, %v2371
        %v2383 = vsel %vm2157, %v2382, %v2375
        %vm2384 = vcmask 293888
        %v2386 = vsel %vm2384, %v937, 0
        %vm2388 = vcmask 1041408
        %v2389 = vsel %vm2388, %v2165, 0
        %v2391 = vsel %vm2388, %v2212, 0
        %2393 = vmatprep.subr.bf16.mxu0 0
        %2394 = vmatpush1.bf16.msra.mxu0 0
        %2395 = vmatprep.subr.bf16.mxu0 0
        %2396 = vmatpush1.bf16.msra.mxu0 0
        %2397 = vmatprep.subr.bf16.mxu0 0
        %2398 = vmatpush1.bf16.msra.mxu0 0
        %2399 = vmatprep.subr.bf16.mxu0 0
        %2400 = vmatpush1.bf16.msra.mxu0 0
        %2401 = vmatprep.subr.bf16.mxu0 0
        %2402 = vmatpush1.bf16.msra.mxu0 0
        %2403 = vmatprep.subr.bf16.mxu0 %v2391
        %2404 = vmatpush1.bf16.msra.mxu0 %v2389
        %2405 = vmatprep.subr.bf16.mxu0 %v2209
        %2406 = vmatpush1.bf16.msra.mxu0 %v2162
        %2407 = vmatprep.subr.bf16.mxu0 %v2206
        %2408 = vmatpush1.bf16.msra.mxu0 %v2159
        %2409 = vmatprep.subr.bf16.mxu0 0
        %2410 = vmatpush2.bf16.msra.mxu0 0
        %2411 = vmatprep.subr.bf16.mxu0 0
        %2412 = vmatpush2.bf16.msra.mxu0 0
        %2413 = vmatprep.subr.bf16.mxu0 0
        %2414 = vmatpush2.bf16.msra.mxu0 0
        %2415 = vmatprep.subr.bf16.mxu0 0
        %2416 = vmatpush2.bf16.msra.mxu0 0
        %2417 = vmatprep.subr.bf16.mxu0 0
        %2418 = vmatpush2.bf16.msra.mxu0 0
        %2419 = vmatprep.subr.bf16.mxu0 0
        %2420 = vmatpush2.bf16.msra.mxu0 0
        %2421 = vmatprep.subr.bf16.mxu0 0
        %2422 = vmatpush2.bf16.msra.mxu0 0
        %2423 = vmatprep.subr.bf16.mxu0 0
        %2424 = vmatpush2.bf16.msra.mxu0 0
        %2425 = vmatprep.mubr.bf16.mxu0 0
        %2426 = vmatmul.mubr.bf16.gmra.mxu0 %v2386
        %v2427 = vpop.f32.mrf.mxu0
        %v2428 = vadd.f32 %v2383, %v2427
        %v2429 = vpop.f32.mrf.mxu0
        %v2430 = vadd.f32 %v2383, %v2429
        %v2431 = vpop.f32.mrf.mxu0
        %v2432 = vpop.f32.mrf.mxu0
        %2433 = vdwg.mxu0
        %2435 = vrot.lane.b32.xlu0 %v2428, 112
        %v2436 = vpop.permute.xlu0 %2435
        %2438 = vrot.lane.b32.xlu0 %v2428, 96
        %v2439 = vpop.permute.xlu0 %2438
        %2441 = vrot.lane.b32.xlu0 %v2428, 80
        %v2442 = vpop.permute.xlu0 %2441
        %2444 = vrot.lane.b32.xlu0 %v2428, 64
        %v2445 = vpop.permute.xlu0 %2444
        %2447 = vrot.lane.b32.xlu0 %v2428, 48
        %v2448 = vpop.permute.xlu0 %2447
        %2450 = vrot.lane.b32.xlu0 %v2428, 32
        %v2451 = vpop.permute.xlu0 %2450
        %2453 = vrot.lane.b32.xlu0 %v2428, 16
        %v2454 = vpop.permute.xlu0 %2453
        %2457 = vrot.lane.b32.xlu0 %v2430, 112
        %v2458 = vpop.permute.xlu0 %2457
        %2460 = vrot.lane.b32.xlu0 %v2430, 96
        %v2461 = vpop.permute.xlu0 %2460
        %2463 = vrot.lane.b32.xlu0 %v2430, 80
        %v2464 = vpop.permute.xlu0 %2463
        %2466 = vrot.lane.b32.xlu0 %v2430, 64
        %v2467 = vpop.permute.xlu0 %2466
        %2469 = vrot.lane.b32.xlu0 %v2430, 48
        %v2470 = vpop.permute.xlu0 %2469
        %2472 = vrot.lane.b32.xlu0 %v2430, 32
        %v2473 = vpop.permute.xlu0 %2472
        %2475 = vrot.lane.b32.xlu0 %v2430, 16
        %v2476 = vpop.permute.xlu0 %2475
        %v2478 = vcombine.low %v2428, %v2439
        %v2479 = vcombine.high %v2428, %v2439
        %v2481 = vunpack.c.l.s4 1983009808
        %v2482 = vunpack.c.0.s8 %v2481
        %v2483 = vlaneseq
        %v2484 = vshrl.u32 %v2483, 7
        %v2485 = vsub.s32 %v2482, %v2484
        %v2486 = vrot.slane %v2478, %v2485
        %v2488 = vunpack.c.l.s4 1983009808
        %v2489 = vunpack.c.0.s8 %v2488
        %v2490 = vlaneseq
        %v2491 = vshrl.u32 %v2490, 7
        %v2492 = vsub.s32 %v2489, %v2491
        %v2493 = vrot.slane %v2479, %v2492
        %v2494 = vcombine.low %v2436, %v2442
        %v2495 = vcombine.high %v2436, %v2442
        %v2497 = vunpack.c.l.s4 1983009808
        %v2498 = vunpack.c.0.s8 %v2497
        %v2499 = vlaneseq
        %v2500 = vshrl.u32 %v2499, 7
        %v2501 = vsub.s32 %v2498, %v2500
        %v2502 = vrot.slane %v2494, %v2501
        %v2504 = vunpack.c.l.s4 1983009808
        %v2505 = vunpack.c.0.s8 %v2504
        %v2506 = vlaneseq
        %v2507 = vshrl.u32 %v2506, 7
        %v2508 = vsub.s32 %v2505, %v2507
        %v2509 = vrot.slane %v2495, %v2508
        %v2510 = vcombine.low %v2445, %v2451
        %v2511 = vcombine.high %v2445, %v2451
        %v2513 = vunpack.c.l.s4 1983009808
        %v2514 = vunpack.c.0.s8 %v2513
        %v2515 = vlaneseq
        %v2516 = vshrl.u32 %v2515, 7
        %v2517 = vsub.s32 %v2514, %v2516
        %v2518 = vrot.slane %v2510, %v2517
        %v2520 = vunpack.c.l.s4 1983009808
        %v2521 = vunpack.c.0.s8 %v2520
        %v2522 = vlaneseq
        %v2523 = vshrl.u32 %v2522, 7
        %v2524 = vsub.s32 %v2521, %v2523
        %v2525 = vrot.slane %v2511, %v2524
        %v2526 = vcombine.low %v2448, %v2454
        %v2527 = vcombine.high %v2448, %v2454
        %v2529 = vunpack.c.l.s4 1983009808
        %v2530 = vunpack.c.0.s8 %v2529
        %v2531 = vlaneseq
        %v2532 = vshrl.u32 %v2531, 7
        %v2533 = vsub.s32 %v2530, %v2532
        %v2534 = vrot.slane %v2526, %v2533
        %v2536 = vunpack.c.l.s4 1983009808
        %v2537 = vunpack.c.0.s8 %v2536
        %v2538 = vlaneseq
        %v2539 = vshrl.u32 %v2538, 7
        %v2540 = vsub.s32 %v2537, %v2539
        %v2541 = vrot.slane %v2527, %v2540
        %v2542 = vcombine.low %v2486, %v2502
        %v2543 = vcombine.high %v2486, %v2502
        %v2545 = vunpack.c.l.s4 1934713408
        %v2546 = vunpack.c.0.s8 %v2545
        %v2547 = vlaneseq
        %v2548 = vshrl.u32 %v2547, 7
        %v2549 = vsub.s32 %v2546, %v2548
        %v2550 = vrot.slane %v2542, %v2549
        %v2552 = vunpack.c.l.s4 1934713408
        %v2553 = vunpack.c.0.s8 %v2552
        %v2554 = vlaneseq
        %v2555 = vshrl.u32 %v2554, 7
        %v2556 = vsub.s32 %v2553, %v2555
        %v2557 = vrot.slane %v2543, %v2556
        %v2558 = vcombine.low %v2493, %v2509
        %v2559 = vcombine.high %v2493, %v2509
        %v2561 = vunpack.c.l.s4 1934713408
        %v2562 = vunpack.c.0.s8 %v2561
        %v2563 = vlaneseq
        %v2564 = vshrl.u32 %v2563, 7
        %v2565 = vsub.s32 %v2562, %v2564
        %v2566 = vrot.slane %v2558, %v2565
        %v2568 = vunpack.c.l.s4 1934713408
        %v2569 = vunpack.c.0.s8 %v2568
        %v2570 = vlaneseq
        %v2571 = vshrl.u32 %v2570, 7
        %v2572 = vsub.s32 %v2569, %v2571
        %v2573 = vrot.slane %v2559, %v2572
        %v2574 = vcombine.low %v2518, %v2534
        %v2575 = vcombine.high %v2518, %v2534
        %v2577 = vunpack.c.l.s4 1934713408
        %v2578 = vunpack.c.0.s8 %v2577
        %v2579 = vlaneseq
        %v2580 = vshrl.u32 %v2579, 7
        %v2581 = vsub.s32 %v2578, %v2580
        %v2582 = vrot.slane %v2574, %v2581
        %v2584 = vunpack.c.l.s4 1934713408
        %v2585 = vunpack.c.0.s8 %v2584
        %v2586 = vlaneseq
        %v2587 = vshrl.u32 %v2586, 7
        %v2588 = vsub.s32 %v2585, %v2587
        %v2589 = vrot.slane %v2575, %v2588
        %v2590 = vcombine.low %v2525, %v2541
        %v2591 = vcombine.high %v2525, %v2541
        %v2593 = vunpack.c.l.s4 1934713408
        %v2594 = vunpack.c.0.s8 %v2593
        %v2595 = vlaneseq
        %v2596 = vshrl.u32 %v2595, 7
        %v2597 = vsub.s32 %v2594, %v2596
        %v2598 = vrot.slane %v2590, %v2597
        %v2600 = vunpack.c.l.s4 1934713408
        %v2601 = vunpack.c.0.s8 %v2600
        %v2602 = vlaneseq
        %v2603 = vshrl.u32 %v2602, 7
        %v2604 = vsub.s32 %v2601, %v2603
        %v2605 = vrot.slane %v2591, %v2604
        %v2606 = vcombine.low %v2550, %v2582
        %v2607 = vcombine.high %v2550, %v2582
        %v2608 = vcombine.low %v2557, %v2589
        %v2609 = vcombine.high %v2557, %v2589
        %v2610 = vcombine.low %v2566, %v2598
        %v2611 = vcombine.high %v2566, %v2598
        %v2612 = vcombine.low %v2573, %v2605
        %v2613 = vcombine.high %v2573, %v2605
        %v2614 = vcombine.low %v2430, %v2461
        %v2615 = vcombine.high %v2430, %v2461
        %v2617 = vunpack.c.l.s4 1983009808
        %v2618 = vunpack.c.0.s8 %v2617
        %v2619 = vlaneseq
        %v2620 = vshrl.u32 %v2619, 7
        %v2621 = vsub.s32 %v2618, %v2620
        %v2622 = vrot.slane %v2614, %v2621
        %v2624 = vunpack.c.l.s4 1983009808
        %v2625 = vunpack.c.0.s8 %v2624
        %v2626 = vlaneseq
        %v2627 = vshrl.u32 %v2626, 7
        %v2628 = vsub.s32 %v2625, %v2627
        %v2629 = vrot.slane %v2615, %v2628
        %v2630 = vcombine.low %v2458, %v2464
        %v2631 = vcombine.high %v2458, %v2464
        %v2633 = vunpack.c.l.s4 1983009808
        %v2634 = vunpack.c.0.s8 %v2633
        %v2635 = vlaneseq
        %v2636 = vshrl.u32 %v2635, 7
        %v2637 = vsub.s32 %v2634, %v2636
        %v2638 = vrot.slane %v2630, %v2637
        %v2640 = vunpack.c.l.s4 1983009808
        %v2641 = vunpack.c.0.s8 %v2640
        %v2642 = vlaneseq
        %v2643 = vshrl.u32 %v2642, 7
        %v2644 = vsub.s32 %v2641, %v2643
        %v2645 = vrot.slane %v2631, %v2644
        %v2646 = vcombine.low %v2467, %v2473
        %v2647 = vcombine.high %v2467, %v2473
        %v2649 = vunpack.c.l.s4 1983009808
        %v2650 = vunpack.c.0.s8 %v2649
        %v2651 = vlaneseq
        %v2652 = vshrl.u32 %v2651, 7
        %v2653 = vsub.s32 %v2650, %v2652
        %v2654 = vrot.slane %v2646, %v2653
        %v2656 = vunpack.c.l.s4 1983009808
        %v2657 = vunpack.c.0.s8 %v2656
        %v2658 = vlaneseq
        %v2659 = vshrl.u32 %v2658, 7
        %v2660 = vsub.s32 %v2657, %v2659
        %v2661 = vrot.slane %v2647, %v2660
        %v2662 = vcombine.low %v2470, %v2476
        %v2663 = vcombine.high %v2470, %v2476
        %v2665 = vunpack.c.l.s4 1983009808
        %v2666 = vunpack.c.0.s8 %v2665
        %v2667 = vlaneseq
        %v2668 = vshrl.u32 %v2667, 7
        %v2669 = vsub.s32 %v2666, %v2668
        %v2670 = vrot.slane %v2662, %v2669
        %v2672 = vunpack.c.l.s4 1983009808
        %v2673 = vunpack.c.0.s8 %v2672
        %v2674 = vlaneseq
        %v2675 = vshrl.u32 %v2674, 7
        %v2676 = vsub.s32 %v2673, %v2675
        %v2677 = vrot.slane %v2663, %v2676
        %v2678 = vcombine.low %v2622, %v2638
        %v2679 = vcombine.high %v2622, %v2638
        %v2681 = vunpack.c.l.s4 1934713408
        %v2682 = vunpack.c.0.s8 %v2681
        %v2683 = vlaneseq
        %v2684 = vshrl.u32 %v2683, 7
        %v2685 = vsub.s32 %v2682, %v2684
        %v2686 = vrot.slane %v2678, %v2685
        %v2688 = vunpack.c.l.s4 1934713408
        %v2689 = vunpack.c.0.s8 %v2688
        %v2690 = vlaneseq
        %v2691 = vshrl.u32 %v2690, 7
        %v2692 = vsub.s32 %v2689, %v2691
        %v2693 = vrot.slane %v2679, %v2692
        %v2694 = vcombine.low %v2629, %v2645
        %v2695 = vcombine.high %v2629, %v2645
        %v2697 = vunpack.c.l.s4 1934713408
        %v2698 = vunpack.c.0.s8 %v2697
        %v2699 = vlaneseq
        %v2700 = vshrl.u32 %v2699, 7
        %v2701 = vsub.s32 %v2698, %v2700
        %v2702 = vrot.slane %v2694, %v2701
        %v2704 = vunpack.c.l.s4 1934713408
        %v2705 = vunpack.c.0.s8 %v2704
        %v2706 = vlaneseq
        %v2707 = vshrl.u32 %v2706, 7
        %v2708 = vsub.s32 %v2705, %v2707
        %v2709 = vrot.slane %v2695, %v2708
        %v2710 = vcombine.low %v2654, %v2670
        %v2711 = vcombine.high %v2654, %v2670
        %v2713 = vunpack.c.l.s4 1934713408
        %v2714 = vunpack.c.0.s8 %v2713
        %v2715 = vlaneseq
        %v2716 = vshrl.u32 %v2715, 7
        %v2717 = vsub.s32 %v2714, %v2716
        %v2718 = vrot.slane %v2710, %v2717
        %v2720 = vunpack.c.l.s4 1934713408
        %v2721 = vunpack.c.0.s8 %v2720
        %v2722 = vlaneseq
        %v2723 = vshrl.u32 %v2722, 7
        %v2724 = vsub.s32 %v2721, %v2723
        %v2725 = vrot.slane %v2711, %v2724
        %v2726 = vcombine.low %v2661, %v2677
        %v2727 = vcombine.high %v2661, %v2677
        %v2729 = vunpack.c.l.s4 1934713408
        %v2730 = vunpack.c.0.s8 %v2729
        %v2731 = vlaneseq
        %v2732 = vshrl.u32 %v2731, 7
        %v2733 = vsub.s32 %v2730, %v2732
        %v2734 = vrot.slane %v2726, %v2733
        %v2736 = vunpack.c.l.s4 1934713408
        %v2737 = vunpack.c.0.s8 %v2736
        %v2738 = vlaneseq
        %v2739 = vshrl.u32 %v2738, 7
        %v2740 = vsub.s32 %v2737, %v2739
        %v2741 = vrot.slane %v2727, %v2740
        %v2742 = vcombine.low %v2686, %v2718
        %v2743 = vcombine.high %v2686, %v2718
        %v2744 = vcombine.low %v2693, %v2725
        %v2745 = vcombine.high %v2693, %v2725
        %v2746 = vcombine.low %v2702, %v2734
        %v2747 = vcombine.high %v2702, %v2734
        %v2748 = vcombine.low %v2709, %v2741
        %v2749 = vcombine.high %v2709, %v2741
        %2750 = vst.msk [vmem:[%s217] sm:$0xff] %vm720, %v2606
        %2751 = vst.msk [vmem:[%s217 + $0x8] sm:$0xff] %vm720, %v2742
        %2752 = vst.msk [vmem:[%s217 + $0x10] sm:$0xff] %vm720, %v2607
        %2753 = vst.msk [vmem:[%s217 + $0x18] sm:$0xff] %vm720, %v2743
        %2754 = vst.msk [vmem:[%s217 + $0x20] sm:$0xff] %vm720, %v2608
        %2755 = vst.msk [vmem:[%s217 + $0x28] sm:$0xff] %vm720, %v2744
        %2756 = vst.msk [vmem:[%s217 + $0x30] sm:$0xff] %vm720, %v2609
        %2757 = vst.msk [vmem:[%s217 + $0x38] sm:$0xff] %vm720, %v2745
        %2758 = vst.msk [vmem:[%s217 + $0x40] sm:$0xff] %vm720, %v2610
        %2759 = vst.msk [vmem:[%s217 + $0x48] sm:$0xff] %vm720, %v2746
        %2760 = vst.msk [vmem:[%s217 + $0x50] sm:$0xff] %vm720, %v2611
        %2761 = vst.msk [vmem:[%s217 + $0x58] sm:$0xff] %vm720, %v2747
        %2762 = vst.msk [vmem:[%s217 + $0x60] sm:$0xff] %vm720, %v2612
        %2763 = vst.msk [vmem:[%s217 + $0x68] sm:$0xff] %vm720, %v2748
        %2764 = vst.msk [vmem:[%s217 + $0x70] sm:$0xff] %vm720, %v2613
        %2765 = vst.msk [vmem:[%s217 + $0x78] sm:$0xff] %vm720, %v2749
        %s2766 = sand.u32 %s137, 1
        %s2767 = scalar_lea.sflag [#allocation4], %s2766
        %s2768 = sand.u32 %s137, 1
        %s2769 = smul.addr %s2768, 128
        %s2770 = scalar_lea.vmem [#allocation3], %s2769
        // Predicated region
        $region41: #{deconv_forward.1} parent=39 // pred_check
          %p2771 = pneg %p147
        $region42: #{deconv_forward.1} parent=39 // pred_check_branch
          %2773 = sbr.rel (%p2771) target = $region44
        $region43: #{deconv_forward.1} parent=39 // pred_region
          %s2775 = ssub.s32 2048, 2048
          %2776 = vsyncadd %s2767, %s2775
          %s2777 = smul.addr %s19, 16
          %s2778 = smul.addr %s2777, 128
          %s2779 = scalar_lea.hbm %s5, %s2778
          %s2780 = sshll.u32 %s2770, 4
          %s2781 = int_to_ptr.vmem [resolvable:$true] %s2780
          %2786 = dma.vmem_to_hbm [thread:$0]  %s2781, 2048, %s2779, %s2767, 128, 128, 8
        $region44: #{deconv_forward.1} parent=39 // pred_fallthru
          _
      $region40: #{deconv_forward.1} parent=5 // pred_fallthru
        _
      %p2787 = scmp.le.s32.totalorder 2, %s14
      // Predicated region
      $region45: #{deconv_forward.1} parent=5 // pred_check
        %p2788 = pneg %p2787
      $region46: #{deconv_forward.1} parent=5 // pred_check_branch
        %2790 = sbr.rel (%p2788) target = $region48
      $region47: #{deconv_forward.1} parent=5 // pred_region
        %s2791 = ssub.s32 %s14, 2
        // Predicated region
        $region49: #{deconv_forward.1} parent=47 // pred_check
          %p2792 = pneg %p153
        $region50: #{deconv_forward.1} parent=47 // pred_check_branch
          %2794 = sbr.rel (%p2792) target = $region52
        $region51: #{deconv_forward.1} parent=47 // pred_region
          %s2795 = sand.u32 %s138, 1
          %s2796 = scalar_lea.sflag [#allocation4], %s2795
          %s2797 = sand.u32 %s138, 1
          %s2798 = smul.addr %s2797, 128
          %s2799 = scalar_lea.vmem [#allocation3], %s2798
          %2800 = dma.done %s2796, 2048
        $region52: #{deconv_forward.1} parent=47 // pred_fallthru
          _
      $region48: #{deconv_forward.1} parent=5 // pred_fallthru
        _
    $region6: #{deconv_forward.1} parent=1 // loop_footer
      %s18 = sadd.s32 1, %s14
    $region7: #{deconv_forward.1} parent=1 // loop_footer_branch
      %13 = sbr.rel target = $region3
    $region8: #{deconv_forward.1} parent=1 // loop_exit
      _
    %2801 = vsyncpa [#allocation4], 1
    %s2802 = scalar_lea.sflag [#allocation4], 1
    %2803 = vsyncpa %s2802, 1

</llo_original>
